<compile_context>
chip_gen: v7x
topology: tpu7x:2x2x1
jax: 0.10.0
libtpu: 0.0.40
codegen_flags: <defaults>
</compile_context>

<pallas_src>
import functools

import jax
import jax.numpy as jnp
from jax import lax
from jax.experimental import pallas as pl
from jax.experimental.pallas import tpu as pltpu


# ----------------------------- Pallas kernels ------------------------------

def _gram_stats_kernel(x_ref, g_ref, s_ref):
    """Per (batch n, spatial tile): accumulate the per-batch Gram matrix
    G = sum_p x_p x_p^T (MXU, bf16 in / f32 acc) and the per-channel sums of
    x.  BatchNorm batch statistics of the 1x1-conv output are recovered in
    the wrapper as w G w^T and w . sum(x), so stage 1 emits only O(Cs^2)
    scalars per batch and never materializes the conv output in HBM."""
    s_idx = pl.program_id(1)

    @pl.when(s_idx == 0)
    def _():
        g_ref[...] = jnp.zeros_like(g_ref)
        s_ref[...] = jnp.zeros_like(s_ref)

    x = x_ref[0]                                           # (Cs, TS) bf16
    # A @ A^T: contraction over the lane axis of both operands (MXU "NT").
    g_ref[0] += lax.dot_general(x, x, (((1,), (1,)), ((), ())),
                                preferred_element_type=jnp.float32)
    s_ref[0] += jnp.sum(x.astype(jnp.float32), axis=1, keepdims=True)


def _conv_bn_resize_mse_kernel(x_ref, w_ref, scale_ref, shift_ref, k_ref,
                               t_ref, acc_ref):
    """Per (batch n, channel block): recompute the 1x1 conv for this channel
    block straight from the Cs-channel student stream (no conv-output HBM
    round trip), apply folded BatchNorm + ReLU, resize via one lane-dense
    (Cb, Ss) @ (Ss, St) bf16 MXU matmul against kron(Wy, Wx)^T, and
    accumulate the squared-error partial sum into a lane-dense (1, St)
    resident block -- one block per (n, outer-channel) pair, so both leading
    grid axes can be sharded across TensorCores."""
    ci = pl.program_id(2)

    @pl.when(ci == 0)
    def _():
        acc_ref[...] = jnp.zeros_like(acc_ref)

    # 1x1 conv: (Cb, Cs) @ (Cs, Ss), bf16 inputs, f32 accumulation.
    y = jnp.dot(w_ref[...], x_ref[0], preferred_element_type=jnp.float32)
    # Folded BatchNorm (per-channel scale/shift, lane broadcast) + ReLU.
    z = jnp.maximum(y * scale_ref[...] + shift_ref[...], 0.0)
    # align_corners=True bilinear resize as a single bf16 MXU matmul.
    u = jnp.dot(z.astype(jnp.bfloat16), k_ref[...],
                preferred_element_type=jnp.float32)        # (Cb, St)
    d = u - t_ref[0].astype(jnp.float32)
    acc_ref[0, 0] += jnp.sum(d * d, axis=0, keepdims=True)  # (1, St)


# ------------------------------- glue (JAX) --------------------------------

def _round_up(x, m):
    return (x + m - 1) // m * m


def _vmem_budget_bytes():
    """Generation-aware VMEM budget: (vmem_limit_bytes, per-step block budget).
    128 MiB parts (v5e/v6e) -> ~96 MiB limit; v7x (64 MiB) -> ~48 MiB."""
    try:
        cap = int(pltpu.get_tpu_info().vmem_capacity_bytes)
    except Exception:
        cap = 64 * 1024 * 1024
    cap = min(cap, 128 * 1024 * 1024)
    limit = (cap * 3) // 4
    return int(limit), int((limit * 7) // 10)


def _bilinear_matrix(out_size, in_size):
    """1-D interpolation matrix for bilinear resize with align_corners=True."""
    if out_size == 1 or in_size == 1:
        m = jnp.zeros((out_size, in_size), jnp.float32)
        return m.at[:, 0].set(1.0)
    src = jnp.arange(out_size, dtype=jnp.float32) * (in_size - 1) / (out_size - 1)
    i0 = jnp.clip(jnp.floor(src).astype(jnp.int32), 0, in_size - 1)
    i1 = jnp.clip(i0 + 1, 0, in_size - 1)
    frac = src - i0.astype(jnp.float32)
    rows = jnp.arange(out_size)
    m = jnp.zeros((out_size, in_size), jnp.float32)
    m = m.at[rows, i0].add(1.0 - frac)
    m = m.at[rows, i1].add(frac)
    return m


def _pick_spatial_tile(s_pad, cs, budget):
    """Largest multiple-of-128 divisor of s_pad whose stage-1 working set
    (double-buffered bf16 x block + f32 temporaries) fits ~half the budget."""
    cap = max(128, ((budget // 2) // max(1, 10 * cs)) // 128 * 128)
    t = min(s_pad, cap)
    while t >= 128:
        if s_pad % t == 0:
            return t
        t -= 128
    return 128          # s_pad is a multiple of 128, so 128 always divides


def _pick_channel_block(ct_pad, cs, ss_pad, st_pad, budget, cap=512):
    """Largest multiple-of-8 divisor of ct_pad (<= cap) whose stage-2
    per-step working set (all blocks + main f32 temporaries) fits budget."""
    fixed = (2 * cs * ss_pad * 2          # x block (bf16, double-buffered)
             + 2 * ss_pad * st_pad * 2    # kron matrix (worst case 2 buffers)
             + 2 * st_pad * 4)            # (1, St) accumulator block
    per_c = (2 * cs * 2                   # conv-weight block
             + 2 * 2 * 128 * 4            # BN scale + shift (lane padded)
             + 2 * st_pad * 2             # teacher block
             + ss_pad * 10                # y/z f32 + z bf16 temporaries
             + st_pad * 8)                # u/d f32 temporaries
    best = None
    c = 8
    while c <= min(ct_pad, cap):
        if ct_pad % c == 0 and fixed + c * per_c <= budget:
            best = c
        c += 8
    return best if best is not None else 8


def _split_channel_grid(n_c, n_batch, target_parallel=4):
    """Split the channel-block axis into (outer 'parallel', inner 'arbitrary')
    so batch*outer >= target_parallel even for tiny batches (keeps both v7x
    TensorCores busy); outer = 1 when the batch alone provides parallelism."""
    want = -(-target_parallel // max(1, n_batch))          # ceil division
    if want <= 1 or n_c <= 1:
        return 1, n_c
    for d in range(want, n_c + 1):
        if n_c % d == 0:
            return d, n_c // d
    return n_c, 1


def mose_loss(s_input, t_input, conv_w, conv_b, *, lambdas,
              loss_weight=1.0, reduction="mean", eps=1e-5):
    # TODO(synk): reduction='none' (per-element loss tensor) and the optional
    # `weight` / `avg_factor` arguments of the module are not implemented; the
    # kernel fuses the MSE reduction to a scalar.
    assert reduction in ("mean", "sum")
    N, Cs, Hs, Ws = s_input.shape
    Nt, Ct, Ht, Wt = t_input.shape
    assert N == Nt

    vmem_limit, block_budget = _vmem_budget_bytes()

    S, St = Hs * Ws, Ht * Wt
    S_pad, St_pad = _round_up(S, 128), _round_up(St, 128)
    Ct_pad = _round_up(Ct, 8)
    kron_bytes = S_pad * St_pad * 2

    if kron_bytes > block_budget // 3:
        # TODO(synk): very large feature maps (the kron resize operator would
        # not fit VMEM) fall back to plain XLA rather than a spatially-tiled
        # resize kernel.
        loss = _reference(s_input, t_input, conv_w, conv_b,
                          lambdas=1.0, loss_weight=1.0, eps=eps)
        if reduction == "sum":
            loss = loss * (N * Ct * Ht * Wt)
        return loss_weight * loss * lambdas

    # ---- shared padded bf16 student stream (read by both stages) ----------
    x3 = jnp.pad(s_input.reshape(N, Cs, S), ((0, 0), (0, 0), (0, S_pad - S)))
    x3 = x3.astype(jnp.bfloat16)
    wmat = conv_w.reshape(Ct, Cs).astype(jnp.bfloat16)

    # ---- stage 1: per-batch Gram matrix + channel sums ---------------------
    TS = _pick_spatial_tile(S_pad, Cs, block_budget)
    n_s = S_pad // TS
    gram, sx = pl.pallas_call(
        _gram_stats_kernel,
        out_shape=(jax.ShapeDtypeStruct((N, Cs, Cs), jnp.float32),
                   jax.ShapeDtypeStruct((N, Cs, 1), jnp.float32)),
        grid=(N, n_s),
        in_specs=[pl.BlockSpec((1, Cs, TS), lambda n, s: (n, 0, s))],
        out_specs=(pl.BlockSpec((1, Cs, Cs), lambda n, s: (n, 0, 0)),
                   pl.BlockSpec((1, Cs, 1), lambda n, s: (n, 0, 0))),
        compiler_params=pltpu.CompilerParams(
            dimension_semantics=("parallel", "arbitrary"),
            vmem_limit_bytes=vmem_limit),
    )(x3)

    # ---- BatchNorm batch statistics (training mode, gamma=1, beta=0) -------
    # The conv bias only shifts the per-channel mean, which BN removes, so it
    # cancels exactly and conv_b never enters the kernels.
    w32 = wmat.astype(jnp.float32)                         # (Ct, Cs)
    g = jnp.sum(gram, axis=0)                              # (Cs, Cs)
    sxt = jnp.sum(sx, axis=0)[:, 0]                        # (Cs,)
    m = float(N * S)                                       # real element count
    mean = (w32 @ sxt) / m                                 # (Ct,)
    ex2 = jnp.einsum("oi,ij,oj->o", w32, g, w32) / m
    var = jnp.maximum(ex2 - mean * mean, 0.0)              # biased var (train)
    scale = lax.rsqrt(var + eps)                           # gamma = 1
    shift = -mean * scale                                  # beta = 0
    # Padded output channels get scale = shift = 0 -> z = 0, matching the
    # zero-padded teacher exactly (no contribution to the loss).
    scale = jnp.pad(scale, (0, Ct_pad - Ct)).reshape(Ct_pad, 1)
    shift = jnp.pad(shift, (0, Ct_pad - Ct)).reshape(Ct_pad, 1)

    # ---- stage 2: fused conv + BN + ReLU + kron-resize + MSE ---------------
    cblk = _pick_channel_block(Ct_pad, Cs, S_pad, St_pad, block_budget)
    n_c = Ct_pad // cblk
    n_co, n_ci = _split_channel_grid(n_c, N)

    wpad = jnp.pad(wmat, ((0, Ct_pad - Ct), (0, 0)))       # (Ct_pad, Cs) bf16
    t3 = jnp.pad(t_input.reshape(N, Ct, St),
                 ((0, 0), (0, Ct_pad - Ct), (0, St_pad - St))).astype(jnp.bfloat16)
    wy = _bilinear_matrix(Ht, Hs)                          # (Ht, Hs)
    wx = _bilinear_matrix(Wt, Ws)                          # (Wt, Ws)
    kt = jnp.pad(jnp.kron(wy, wx).T, ((0, S_pad - S), (0, St_pad - St)))
    kt = kt.astype(jnp.bfloat16)                           # (S_pad, St_pad)

    # Single-buffer the constant-index resize operator once it is big enough
    # for the second pipeline buffer to matter.
    if kron_bytes >= 4 * 1024 * 1024:
        k_spec = pl.BlockSpec((S_pad, St_pad), lambda n, co, ci: (0, 0),
                              pipeline_mode=pl.Buffered(1))
    else:
        k_spec = pl.BlockSpec((S_pad, St_pad), lambda n, co, ci: (0, 0))

    cidx = lambda n, co, ci: (co * n_ci + ci, 0)
    acc = pl.pallas_call(
        _conv_bn_resize_mse_kernel,
        out_shape=jax.ShapeDtypeStruct((N, n_co, 1, St_pad), jnp.float32),
        grid=(N, n_co, n_ci),
        in_specs=[
            pl.BlockSpec((1, Cs, S_pad), lambda n, co, ci: (n, 0, 0)),   # x
            pl.BlockSpec((cblk, Cs), cidx),                              # conv w
            pl.BlockSpec((cblk, 1), cidx),                               # BN scale
            pl.BlockSpec((cblk, 1), cidx),                               # BN shift
            k_spec,                                                      # kron
            pl.BlockSpec((1, cblk, St_pad),
                         lambda n, co, ci: (n, co * n_ci + ci, 0)),      # teacher
        ],
        out_specs=pl.BlockSpec((1, 1, 1, St_pad),
                               lambda n, co, ci: (n, co, 0, 0)),
        compiler_params=pltpu.CompilerParams(
            dimension_semantics=("parallel", "parallel", "arbitrary"),
            vmem_limit_bytes=vmem_limit),
    )(x3, wpad, scale, shift, kt, t3)

    sse = jnp.sum(acc)
    if reduction == "mean":
        loss = sse / (N * Ct * Ht * Wt)
    else:
        loss = sse
    return loss_weight * loss * lambdas


def _reference(s_input, t_input, conv_w, conv_b, *, lambdas,
               loss_weight=1.0, eps=1e-5):
    """Pure-JAX reference: f32 math on the same bf16-quantized operands the
    kernel ingests (student, conv weight, teacher, and the bilinear resize
    operator); only the activation bf16 cast / accumulation order differ."""
    N, Cs, Hs, Ws = s_input.shape
    _, Ct, Ht, Wt = t_input.shape
    x = s_input.astype(jnp.bfloat16).astype(jnp.float32)
    w = conv_w.reshape(Ct, Cs).astype(jnp.bfloat16).astype(jnp.float32)
    t = t_input.astype(jnp.bfloat16).astype(jnp.float32)
    y = jnp.einsum("nihw,oi->nohw", x, w)
    y = y + conv_b.astype(jnp.float32)[None, :, None, None]
    mean = y.mean(axis=(0, 2, 3), keepdims=True)
    var = y.var(axis=(0, 2, 3), keepdims=True)
    z = jnp.maximum((y - mean) * lax.rsqrt(var + eps), 0.0)
    wy = _bilinear_matrix(Ht, Hs)
    wx = _bilinear_matrix(Wt, Ws)
    k = jnp.kron(wy, wx).astype(jnp.bfloat16).astype(jnp.float32)  # (St, Ss)
    u = jnp.einsum("ncs,ts->nct", z.reshape(N, Ct, Hs * Ws), k)
    mse = jnp.mean((u.reshape(N, Ct, Ht, Wt) - t) ** 2)
    return loss_weight * mse * lambdas


if __name__ == "__main__":
    key = jax.random.PRNGKey(0)
    k1, k2, k3, k4 = jax.random.split(key, 4)

    N, Cs, Hs, Ws = 2, 8, 16, 16        # student feature map
    Ct, Ht, Wt = 16, 32, 32             # teacher feature map
    s_input = jax.random.normal(k1, (N, Cs, Hs, Ws), jnp.float32)
    t_input = jax.random.normal(k2, (N, Ct, Ht, Wt), jnp.float32)

    # 1x1-conv parameters (PyTorch shapes: (Ct, Cs, 1, 1), (Ct,)).
    conv_w = jax.random.normal(k3, (Ct, Cs, 1, 1), jnp.float32) / jnp.sqrt(Cs)
    conv_b = jax.random.normal(k4, (Ct,), jnp.float32) * 0.1

    fn = jax.jit(functools.partial(mose_loss, lambdas=0.5, loss_weight=1.0))
    loss = jax.block_until_ready(fn(s_input, t_input, conv_w, conv_b))

    ref = _reference(s_input, t_input, conv_w, conv_b,
                     lambdas=0.5, loss_weight=1.0)
    assert jnp.allclose(loss, ref, rtol=5e-3, atol=1e-6), (float(loss), float(ref))

    print("KERNEL_OK")
</pallas_src>

<mosaic_0001>
module attributes {stable_mosaic.version = 11 : i64} {
  func.func private @main(%arg0: i32) attributes {dimension_semantics = [#tpu.dimension_semantics<core_parallel>], iteration_bounds = array<i64: 2>, tpu.core_type = #tpu.core_type<sc_scalar_subcore>, window_params = []} {
    return
  }
}

module attributes {stable_mosaic.version = 11 : i64} {
  func.func private @main(%arg0: i32) attributes {dimension_semantics = [#tpu.dimension_semantics<core_parallel>], iteration_bounds = array<i64: 2>, tpu.core_type = #tpu.core_type<sc_scalar_subcore>, window_params = []} {
    return
  }
}

module attributes {stable_mosaic.version = 11 : i64} {
  func.func @_gram_stats_kernel(%arg0: i32, %arg1: i32, %arg2: memref<1x8x256xbf16, #tpu.memory_space<vmem>>, %arg3: memref<1x8x8xf32, #tpu.memory_space<vmem>>, %arg4: memref<1x8x1xf32, #tpu.memory_space<vmem>>) attributes {dimension_semantics = [#tpu.dimension_semantics<parallel>, #tpu.dimension_semantics<arbitrary>], iteration_bounds = array<i64: 2, 1>, scalar_prefetch = 0 : i64, scratch_operands = 0 : i64, tpu.core_type = #tpu.core_type<tc>, window_params = [{transform_indices = @transform_0, window_bounds = array<i64: 1, 8, 256>}, {transform_indices = @transform_1, window_bounds = array<i64: 1, 8, 8>}, {transform_indices = @transform_2, window_bounds = array<i64: 1, 8, 1>}]} {
    %c0_i32 = arith.constant 0 : i32
    %0 = arith.cmpi eq, %arg1, %c0_i32 : i32
    %1 = arith.extui %0 : i1 to i32
    %c0_i32_0 = arith.constant 0 : i32
    %2 = arith.cmpi ne, %1, %c0_i32_0 : i32
    scf.if %2 {
      %cst_16 = arith.constant 0.000000e+00 : f32
      %21 = vector.broadcast %cst_16 : f32 to vector<1x8x8xf32>
      %c0_17 = arith.constant 0 : index
      %c0_18 = arith.constant 0 : index
      %c0_19 = arith.constant 0 : index
      %22 = vector.load %arg3[%c0_17, %c0_18, %c0_19] : memref<1x8x8xf32, #tpu.memory_space<vmem>>, vector<1x8x8xf32>
      tpu.vector_store %arg3[%c0_17, %c0_18, %c0_19], %21 {strides = array<i32>} : memref<1x8x8xf32, #tpu.memory_space<vmem>>, vector<1x8x8xf32>,
      %cst_20 = arith.constant 0.000000e+00 : f32
      %23 = vector.broadcast %cst_20 : f32 to vector<1x8x1xf32>
      %c0_21 = arith.constant 0 : index
      %c0_22 = arith.constant 0 : index
      %c0_23 = arith.constant 0 : index
      %24 = vector.load %arg4[%c0_21, %c0_22, %c0_23] : memref<1x8x1xf32, #tpu.memory_space<vmem>>, vector<1x8x1xf32>
      tpu.vector_store %arg4[%c0_21, %c0_22, %c0_23], %23 {strides = array<i32>} : memref<1x8x1xf32, #tpu.memory_space<vmem>>, vector<1x8x1xf32>,
    } else {
    }
    %c0 = arith.constant 0 : index
    %c0_1 = arith.constant 0 : index
    %c0_2 = arith.constant 0 : index
    %3 = vector.load %arg2[%c0, %c0_1, %c0_2] : memref<1x8x256xbf16, #tpu.memory_space<vmem>>, vector<1x8x256xbf16>
    %4 = vector.shape_cast %3 : vector<1x8x256xbf16> to vector<8x256xbf16>
    %c0_3 = arith.constant 0 : index
    %c0_4 = arith.constant 0 : index
    %c0_5 = arith.constant 0 : index
    %5 = vector.load %arg3[%c0_3, %c0_4, %c0_5] : memref<1x8x8xf32, #tpu.memory_space<vmem>>, vector<1x8x8xf32>
    %6 = vector.shape_cast %5 : vector<1x8x8xf32> to vector<8x8xf32>
    %cst = arith.constant dense<0.000000e+00> : vector<8x8xf32>
    %7 = tpu.matmul %4, %4, %cst {dimension_numbers = #tpu.dot_dimension_numbers<[1], [1], [0], [0], [0, 0, 1, 0], [], []>} : vector<8x256xbf16>, vector<8x256xbf16>, vector<8x8xf32> -> vector<8x8xf32>
    %8 = arith.addf %6, %7 : vector<8x8xf32>
    %c0_6 = arith.constant 0 : index
    %c0_7 = arith.constant 0 : index
    %c0_8 = arith.constant 0 : index
    %9 = vector.load %arg3[%c0_6, %c0_7, %c0_8] : memref<1x8x8xf32, #tpu.memory_space<vmem>>, vector<1x8x8xf32>
    %10 = vector.shape_cast %9 : vector<1x8x8xf32> to vector<8x8xf32>
    %11 = vector.shape_cast %8 : vector<8x8xf32> to vector<1x8x8xf32>
    tpu.vector_store %arg3[%c0_6, %c0_7, %c0_8], %11 {strides = array<i32>} : memref<1x8x8xf32, #tpu.memory_space<vmem>>, vector<1x8x8xf32>,
    %c0_9 = arith.constant 0 : index
    %c0_10 = arith.constant 0 : index
    %c0_11 = arith.constant 0 : index
    %12 = vector.load %arg4[%c0_9, %c0_10, %c0_11] : memref<1x8x1xf32, #tpu.memory_space<vmem>>, vector<1x8x1xf32>
    %13 = vector.shape_cast %12 : vector<1x8x1xf32> to vector<8x1xf32>
    %14 = arith.extf %4 : vector<8x256xbf16> to vector<8x256xf32>
    %cst_12 = arith.constant dense<0.000000e+00> : vector<8xf32>
    %15 = vector.multi_reduction <add>, %14, %cst_12 [1] : vector<8x256xf32> to vector<8xf32>
    %16 = vector.shape_cast %15 : vector<8xf32> to vector<8x1xf32>
    %17 = arith.addf %13, %16 : vector<8x1xf32>
    %c0_13 = arith.constant 0 : index
    %c0_14 = arith.constant 0 : index
    %c0_15 = arith.constant 0 : index
    %18 = vector.load %arg4[%c0_13, %c0_14, %c0_15] : memref<1x8x1xf32, #tpu.memory_space<vmem>>, vector<1x8x1xf32>
    %19 = vector.shape_cast %18 : vector<1x8x1xf32> to vector<8x1xf32>
    %20 = vector.shape_cast %17 : vector<8x1xf32> to vector<1x8x1xf32>
    tpu.vector_store %arg4[%c0_13, %c0_14, %c0_15], %20 {strides = array<i32>} : memref<1x8x1xf32, #tpu.memory_space<vmem>>, vector<1x8x1xf32>,
    return
  }
  func.func @transform_0(%arg0: i32, %arg1: i32) -> (i32, i32, i32) {
    %c0_i32 = arith.constant 0 : i32
    %c0_i32_0 = arith.constant 0 : i32
    return %arg0, %c0_i32, %arg1 : i32, i32, i32
  }
  func.func @transform_1(%arg0: i32, %arg1: i32) -> (i32, i32, i32) {
    %c0_i32 = arith.constant 0 : i32
    %c0_i32_0 = arith.constant 0 : i32
    %c0_i32_1 = arith.constant 0 : i32
    return %arg0, %c0_i32, %c0_i32_0 : i32, i32, i32
  }
  func.func @transform_2(%arg0: i32, %arg1: i32) -> (i32, i32, i32) {
    %c0_i32 = arith.constant 0 : i32
    %c0_i32_0 = arith.constant 0 : i32
    %c0_i32_1 = arith.constant 0 : i32
    return %arg0, %c0_i32, %c0_i32_0 : i32, i32, i32
  }
}

module attributes {stable_mosaic.version = 11 : i64} {
  func.func @_conv_bn_resize_mse_kernel(%arg0: i32, %arg1: i32, %arg2: i32, %arg3: memref<1x8x256xbf16, #tpu.memory_space<vmem>>, %arg4: memref<16x8xbf16, #tpu.memory_space<vmem>>, %arg5: memref<16x1xf32, #tpu.memory_space<vmem>>, %arg6: memref<16x1xf32, #tpu.memory_space<vmem>>, %arg7: memref<256x1024xbf16, #tpu.memory_space<vmem>>, %arg8: memref<1x16x1024xbf16, #tpu.memory_space<vmem>>, %arg9: memref<1x1x1x1024xf32, #tpu.memory_space<vmem>>) attributes {dimension_semantics = [#tpu.dimension_semantics<parallel>, #tpu.dimension_semantics<parallel>, #tpu.dimension_semantics<arbitrary>], iteration_bounds = array<i64: 2, 1, 1>, scalar_prefetch = 0 : i64, scratch_operands = 0 : i64, tpu.core_type = #tpu.core_type<tc>, window_params = [{transform_indices = @transform_0, window_bounds = array<i64: 1, 8, 256>}, {transform_indices = @transform_1, window_bounds = array<i64: 16, 8>}, {transform_indices = @transform_2, window_bounds = array<i64: 16, 1>}, {transform_indices = @transform_3, window_bounds = array<i64: 16, 1>}, {pipeline_mode = #tpu.pipeline_mode<synchronous>, transform_indices = @transform_4, window_bounds = array<i64: 256, 1024>}, {transform_indices = @transform_5, window_bounds = array<i64: 1, 16, 1024>}, {transform_indices = @transform_6, window_bounds = array<i64: 1, 1, 1, 1024>}]} {
    %c0_i32 = arith.constant 0 : i32
    %0 = arith.cmpi eq, %arg2, %c0_i32 : i32
    %1 = arith.extui %0 : i1 to i32
    %c0_i32_0 = arith.constant 0 : i32
    %2 = arith.cmpi ne, %1, %c0_i32_0 : i32
    scf.if %2 {
      %cst_25 = arith.constant 0.000000e+00 : f32
      %31 = vector.broadcast %cst_25 : f32 to vector<1x1x1x1024xf32>
      %c0_26 = arith.constant 0 : index
      %c0_27 = arith.constant 0 : index
      %c0_28 = arith.constant 0 : index
      %c0_29 = arith.constant 0 : index
      %32 = vector.load %arg9[%c0_26, %c0_27, %c0_28, %c0_29] : memref<1x1x1x1024xf32, #tpu.memory_space<vmem>>, vector<1x1x1x1024xf32>
      tpu.vector_store %arg9[%c0_26, %c0_27, %c0_28, %c0_29], %31 {strides = array<i32>} : memref<1x1x1x1024xf32, #tpu.memory_space<vmem>>, vector<1x1x1x1024xf32>,
    } else {
    }
    %c0 = arith.constant 0 : index
    %c0_1 = arith.constant 0 : index
    %3 = vector.load %arg4[%c0, %c0_1] : memref<16x8xbf16, #tpu.memory_space<vmem>>, vector<16x8xbf16>
    %c0_2 = arith.constant 0 : index
    %c0_3 = arith.constant 0 : index
    %c0_4 = arith.constant 0 : index
    %4 = vector.load %arg3[%c0_2, %c0_3, %c0_4] : memref<1x8x256xbf16, #tpu.memory_space<vmem>>, vector<1x8x256xbf16>
    %5 = vector.shape_cast %4 : vector<1x8x256xbf16> to vector<8x256xbf16>
    %cst = arith.constant dense<0.000000e+00> : vector<16x256xf32>
    %6 = tpu.matmul %3, %5, %cst {dimension_numbers = #tpu.dot_dimension_numbers<[1], [0], [0], [1], [0, 0, 1, 1], [], []>} : vector<16x8xbf16>, vector<8x256xbf16>, vector<16x256xf32> -> vector<16x256xf32>
    %c0_5 = arith.constant 0 : index
    %c0_6 = arith.constant 0 : index
    %7 = vector.load %arg5[%c0_5, %c0_6] : memref<16x1xf32, #tpu.memory_space<vmem>>, vector<16x1xf32>
    %8 = vector.broadcast %7 : vector<16x1xf32> to vector<16x256xf32>
    %9 = arith.mulf %6, %8 : vector<16x256xf32>
    %c0_7 = arith.constant 0 : index
    %c0_8 = arith.constant 0 : index
    %10 = vector.load %arg6[%c0_7, %c0_8] : memref<16x1xf32, #tpu.memory_space<vmem>>, vector<16x1xf32>
    %11 = vector.broadcast %10 : vector<16x1xf32> to vector<16x256xf32>
    %12 = arith.addf %9, %11 : vector<16x256xf32>
    %cst_9 = arith.constant 0.000000e+00 : f32
    %13 = vector.broadcast %cst_9 : f32 to vector<16x256xf32>
    %14 = arith.maximumf %12, %13 : vector<16x256xf32>
    %15 = arith.truncf %14 : vector<16x256xf32> to vector<16x256xbf16>
    %c0_10 = arith.constant 0 : index
    %c0_11 = arith.constant 0 : index
    %16 = vector.load %arg7[%c0_10, %c0_11] : memref<256x1024xbf16, #tpu.memory_space<vmem>>, vector<256x1024xbf16>
    %cst_12 = arith.constant dense<0.000000e+00> : vector<16x1024xf32>
    %17 = tpu.matmul %15, %16, %cst_12 {dimension_numbers = #tpu.dot_dimension_numbers<[1], [0], [0], [1], [0, 0, 1, 1], [], []>} : vector<16x256xbf16>, vector<256x1024xbf16>, vector<16x1024xf32> -> vector<16x1024xf32>
    %c0_13 = arith.constant 0 : index
    %c0_14 = arith.constant 0 : index
    %c0_15 = arith.constant 0 : index
    %18 = vector.load %arg8[%c0_13, %c0_14, %c0_15] : memref<1x16x1024xbf16, #tpu.memory_space<vmem>>, vector<1x16x1024xbf16>
    %19 = vector.shape_cast %18 : vector<1x16x1024xbf16> to vector<16x1024xbf16>
    %20 = arith.extf %19 : vector<16x1024xbf16> to vector<16x1024xf32>
    %21 = arith.subf %17, %20 : vector<16x1024xf32>
    %c0_16 = arith.constant 0 : index
    %c0_17 = arith.constant 0 : index
    %c0_18 = arith.constant 0 : index
    %c0_19 = arith.constant 0 : index
    %22 = vector.load %arg9[%c0_16, %c0_17, %c0_18, %c0_19] : memref<1x1x1x1024xf32, #tpu.memory_space<vmem>>, vector<1x1x1x1024xf32>
    %23 = vector.shape_cast %22 : vector<1x1x1x1024xf32> to vector<1x1024xf32>
    %24 = arith.mulf %21, %21 : vector<16x1024xf32>
    %cst_20 = arith.constant dense<0.000000e+00> : vector<1024xf32>
    %25 = vector.multi_reduction <add>, %24, %cst_20 [0] : vector<16x1024xf32> to vector<1024xf32>
    %26 = vector.shape_cast %25 : vector<1024xf32> to vector<1x1024xf32>
    %27 = arith.addf %23, %26 : vector<1x1024xf32>
    %c0_21 = arith.constant 0 : index
    %c0_22 = arith.constant 0 : index
    %c0_23 = arith.constant 0 : index
    %c0_24 = arith.constant 0 : index
    %28 = vector.load %arg9[%c0_21, %c0_22, %c0_23, %c0_24] : memref<1x1x1x1024xf32, #tpu.memory_space<vmem>>, vector<1x1x1x1024xf32>
    %29 = vector.shape_cast %28 : vector<1x1x1x1024xf32> to vector<1x1024xf32>
    %30 = vector.shape_cast %27 : vector<1x1024xf32> to vector<1x1x1x1024xf32>
    tpu.vector_store %arg9[%c0_21, %c0_22, %c0_23, %c0_24], %30 {strides = array<i32>} : memref<1x1x1x1024xf32, #tpu.memory_space<vmem>>, vector<1x1x1x1024xf32>,
    return
  }
  func.func @transform_0(%arg0: i32, %arg1: i32, %arg2: i32) -> (i32, i32, i32) {
    %c0_i32 = arith.constant 0 : i32
    %c0_i32_0 = arith.constant 0 : i32
    %c0_i32_1 = arith.constant 0 : i32
    return %arg0, %c0_i32, %c0_i32_0 : i32, i32, i32
  }
  func.func @transform_1(%arg0: i32, %arg1: i32, %arg2: i32) -> (i32, i32) {
    %c1_i32 = arith.constant 1 : i32
    %0 = arith.muli %arg1, %c1_i32 : i32
    %1 = arith.addi %0, %arg2 : i32
    %c0_i32 = arith.constant 0 : i32
    %c0_i32_0 = arith.constant 0 : i32
    return %1, %c0_i32 : i32, i32
  }
  func.func @transform_2(%arg0: i32, %arg1: i32, %arg2: i32) -> (i32, i32) {
    %c1_i32 = arith.constant 1 : i32
    %0 = arith.muli %arg1, %c1_i32 : i32
    %1 = arith.addi %0, %arg2 : i32
    %c0_i32 = arith.constant 0 : i32
    %c0_i32_0 = arith.constant 0 : i32
    return %1, %c0_i32 : i32, i32
  }
  func.func @transform_3(%arg0: i32, %arg1: i32, %arg2: i32) -> (i32, i32) {
    %c1_i32 = arith.constant 1 : i32
    %0 = arith.muli %arg1, %c1_i32 : i32
    %1 = arith.addi %0, %arg2 : i32
    %c0_i32 = arith.constant 0 : i32
    %c0_i32_0 = arith.constant 0 : i32
    return %1, %c0_i32 : i32, i32
  }
  func.func @transform_4(%arg0: i32, %arg1: i32, %arg2: i32) -> (i32, i32) {
    %c0_i32 = arith.constant 0 : i32
    %c0_i32_0 = arith.constant 0 : i32
    %c0_i32_1 = arith.constant 0 : i32
    return %c0_i32, %c0_i32_0 : i32, i32
  }
  func.func @transform_5(%arg0: i32, %arg1: i32, %arg2: i32) -> (i32, i32, i32) {
    %c1_i32 = arith.constant 1 : i32
    %0 = arith.muli %arg1, %c1_i32 : i32
    %1 = arith.addi %0, %arg2 : i32
    %c0_i32 = arith.constant 0 : i32
    %c0_i32_0 = arith.constant 0 : i32
    return %arg0, %1, %c0_i32 : i32, i32, i32
  }
  func.func @transform_6(%arg0: i32, %arg1: i32, %arg2: i32) -> (i32, i32, i32, i32) {
    %c0_i32 = arith.constant 0 : i32
    %c0_i32_0 = arith.constant 0 : i32
    %c0_i32_1 = arith.constant 0 : i32
    return %arg0, %arg1, %c0_i32, %c0_i32_0 : i32, i32, i32, i32
  }
}

</mosaic_0001>

<llo_original>
// kernel: mose_loss.2
$region0: #{mose_loss.2}
  #allocation0 [shape = 'u32[]', space=smem, size = 0x4, offset = 0x4, fixed_abs, tag = 'smem constant byte address 0x4 - core index']
  #allocation1 [shape = 'u32[144,128]{1,0:T(1,128)}', space=vmem, size = 0x12000, scoped, tag = 'internal scratch']
  %s0 = inlined_call_operand.vmem [shape: bf16[2,8,256], index: 0, kind: input, shape index: {}]
  %s1 = inlined_call_operand.vmem [shape: f32[2,8,8], index: 1, kind: output, shape index: {0}]
  %s2 = inlined_call_operand.vmem [shape: f32[2,8,1], index: 2, kind: output, shape index: {1}]
  %3 = xla_tuple %s1, %s2
  %s4 = sld [smem:[#allocation0]]
  $region49: #{mose_loss.2} parent=0
    _
  %s6 = ssub.s32 1, %s4
  %s7 = scalar_select 0, %s6, %s4
  loop: start=0, step=1, limit=4
  $region2: #{mose_loss.2} parent=0 // loop_pre_header
    _
  $region3: #{mose_loss.2} parent=0 // loop_header
    %s9 = sphi 0, %s13
    %p10 = scmp.ge.s32.totalorder %s9, 4
    %s16 = sphi 0, %s28
    %s17 = sphi 0, %s24
    %s18 = sphi 0, %s16
    %s19 = sphi 0, %s17
    %s20 = sphi 0, %s18
    %s21 = sphi 0, %s19
    %s33 = sphi 0, %s35
    %s36 = sphi 0, %s33
    %s37 = sphi 0, %s36
    %s53 = sphi 0, %s37
    %s59 = sphi 0, %s61
    %s62 = sphi 0, %s59
    %s63 = sphi 0, %s62
    %s79 = sphi 0, %s63
    %s85 = sphi 0, %s87
    %s88 = sphi 0, %s85
    %s89 = sphi 0, %s88
    %s105 = sphi 0, %s89
  $region4: #{mose_loss.2} parent=0 // loop_header_branch
    %12 = sbr.rel (%p10) target = $region8
  $region5: #{mose_loss.2} parent=0 // loop_body
    %s14 = ssub.s32 %s9, 1
    %s15 = ssub.s32 %s9, 2
    %s22 = sadd.s32 1, %s17
    %p23 = scmp.ge.s32.totalorder %s22, 1
    %s24 = scalar_select %p23, 0, %s22
    %s25 = sadd.s32 1, %s16
    %s26 = scalar_select %p23, %s25, %s16
    %p27 = scmp.ge.s32.totalorder %s26, 2
    %s28 = scalar_select %p27, 0, %s26
    %s29 = ssub.s32 %s16, %s28
    %s30 = ssub.s32 %s17, %s24
    %s31 = sor.u32 %s29, %s30
    %p32 = scmp.eq.s32.totalorder %s31, 0
    %s34 = sadd.s32 %s33, 1
    %s35 = scalar_select %p32, %s33, %s34
    %p38 = pneg %p32
    %p39 = scmp.eq.s32.totalorder %s9, 1
    %p40 = por %p38, %p39
    %p41 = scmp.ne.s32.totalorder %s33, %s36
    %p42 = scmp.eq.s32.totalorder %s9, 0
    %p43 = por %p41, %p42
    %p44 = scmp.ne.s32.totalorder %s33, %s36
    %p45 = scmp.eq.s32.totalorder %s14, 1
    %p46 = por %p44, %p45
    %p47 = scmp.ne.s32.totalorder %s36, %s37
    %p48 = scmp.eq.s32.totalorder %s14, 0
    %p49 = por %p47, %p48
    %p50 = scmp.ne.s32.totalorder %s36, %s37
    %p51 = scmp.eq.s32.totalorder %s15, 1
    %p52 = por %p50, %p51
    %p54 = scmp.ne.s32.totalorder %s37, %s53
    %p55 = scmp.eq.s32.totalorder %s15, 0
    %p56 = por %p54, %p55
    %s57 = ssub.s32 %s16, %s28
    %p58 = scmp.eq.s32.totalorder %s57, 0
    %s60 = sadd.s32 %s59, 1
    %s61 = scalar_select %p58, %s59, %s60
    %p64 = pneg %p58
    %p65 = scmp.eq.s32.totalorder %s9, 1
    %p66 = por %p64, %p65
    %p67 = scmp.ne.s32.totalorder %s59, %s62
    %p68 = scmp.eq.s32.totalorder %s9, 0
    %p69 = por %p67, %p68
    %p70 = scmp.ne.s32.totalorder %s59, %s62
    %p71 = scmp.eq.s32.totalorder %s14, 1
    %p72 = por %p70, %p71
    %p73 = scmp.ne.s32.totalorder %s62, %s63
    %p74 = scmp.eq.s32.totalorder %s14, 0
    %p75 = por %p73, %p74
    %p76 = scmp.ne.s32.totalorder %s62, %s63
    %p77 = scmp.eq.s32.totalorder %s15, 1
    %p78 = por %p76, %p77
    %p80 = scmp.ne.s32.totalorder %s63, %s79
    %p81 = scmp.eq.s32.totalorder %s15, 0
    %p82 = por %p80, %p81
    %s83 = ssub.s32 %s16, %s28
    %p84 = scmp.eq.s32.totalorder %s83, 0
    %s86 = sadd.s32 %s85, 1
    %s87 = scalar_select %p84, %s85, %s86
    %p90 = pneg %p84
    %p91 = scmp.eq.s32.totalorder %s9, 1
    %p92 = por %p90, %p91
    %p93 = scmp.ne.s32.totalorder %s85, %s88
    %p94 = scmp.eq.s32.totalorder %s9, 0
    %p95 = por %p93, %p94
    %p96 = scmp.ne.s32.totalorder %s85, %s88
    %p97 = scmp.eq.s32.totalorder %s14, 1
    %p98 = por %p96, %p97
    %p99 = scmp.ne.s32.totalorder %s88, %s89
    %p100 = scmp.eq.s32.totalorder %s14, 0
    %p101 = por %p99, %p100
    %p102 = scmp.ne.s32.totalorder %s88, %s89
    %p103 = scmp.eq.s32.totalorder %s15, 1
    %p104 = por %p102, %p103
    %p106 = scmp.ne.s32.totalorder %s89, %s105
    %p107 = scmp.eq.s32.totalorder %s15, 0
    %p108 = por %p106, %p107
    %p109 = scmp.le.s32.totalorder 1, %s9
    %p110 = scmp.lt.s32.totalorder %s9, 3
    %p111 = pnand %p109, %p110
    %p112 = pneg %p111
    // Predicated region
    $region9: #{mose_loss.2} parent=5 // pred_check
      _
    $region10: #{mose_loss.2} parent=5 // pred_check_branch
      %114 = sbr.rel (%p111) target = $region12
    $region11: #{mose_loss.2} parent=5 // pred_region
      %s115 = ssub.s32 %s9, 1
    $region12: #{mose_loss.2} parent=5 // pred_fallthru
      _
    %p116 = scmp.lt.s32.totalorder %s9, 2
    // Predicated region
    $region13: #{mose_loss.2} parent=5 // pred_check
      %p117 = pneg %p116
    $region14: #{mose_loss.2} parent=5 // pred_check_branch
      %119 = sbr.rel (%p117) target = $region16
    $region15: #{mose_loss.2} parent=5 // pred_region
      // Predicated region
      $region17: #{mose_loss.2} parent=15 // pred_check
        %p120 = pneg %p43
      $region18: #{mose_loss.2} parent=15 // pred_check_branch
        %122 = sbr.rel (%p120) target = $region20
      $region19: #{mose_loss.2} parent=15 // pred_region
        %s123 = smul.u32 2, %s17
        %p124 = scmp.lt.s32.totalorder %s16, 1
        %s125 = scalar_select %p124, %s16, 1
        %p126 = scmp.lt.s32.totalorder %s123, 1
        %s127 = scalar_select %p126, %s123, 1
        %s128 = smul.addr %s125, 2
        %s129 = sadd.s32 %s127, %s128
        %s130 = smul.addr %s129, 4
        %s131 = scalar_lea.vmem %s0, %s130
        %s132 = smul.u32 2, %s17
      $region20: #{mose_loss.2} parent=15 // pred_fallthru
        _
    $region16: #{mose_loss.2} parent=5 // pred_fallthru
      _
    %p133 = scmp.le.s32.totalorder 1, %s9
    %p134 = scmp.lt.s32.totalorder %s9, 3
    %p135 = pnand %p133, %p134
    %p136 = pneg %p135
    // Predicated region
    $region21: #{mose_loss.2} parent=5 // pred_check
      _
    $region22: #{mose_loss.2} parent=5 // pred_check_branch
      %138 = sbr.rel (%p135) target = $region24
    $region23: #{mose_loss.2} parent=5 // pred_region
      %s139 = ssub.s32 %s9, 1
      %s140 = smul.u32 2, %s19
      %p141 = scmp.lt.s32.totalorder %s18, 1
      %s142 = scalar_select %p141, %s18, 1
      %p143 = scmp.lt.s32.totalorder %s140, 1
      %s144 = scalar_select %p143, %s140, 1
      %s145 = smul.addr %s142, 2
      %s146 = sadd.s32 %s144, %s145
      %s147 = smul.addr %s146, 4
      %s148 = scalar_lea.vmem %s0, %s147
      %p149 = pneg %p49
      %p150 = pneg %p46
      %p151 = pneg %p75
      %p152 = pneg %p72
      %p153 = scmp.lt.s32.totalorder %s18, 1
      %s154 = scalar_select %p153, %s18, 1
      %s155 = smul.addr %s154, 8
      %s156 = scalar_lea.vmem %s1, %s155
      %p157 = pneg %p101
      %p158 = pneg %p98
      %p159 = scmp.lt.s32.totalorder %s18, 1
      %s160 = scalar_select %p159, %s18, 1
      %s161 = smul.addr %s160, 8
      %s162 = scalar_lea.vmem %s2, %s161
      %s163 = smul.u32 2, %s19
      %p164 = scmp.lt.s32.totalorder %s18, 1
      %s165 = scalar_select %p164, %s18, 1
      %p166 = scmp.lt.s32.totalorder %s163, 1
      %s167 = scalar_select %p166, %s163, 1
      %s168 = smul.addr %s165, 2
      %s169 = sadd.s32 %s167, %s168
      %s170 = smul.addr %s169, 4
      %s171 = scalar_lea.vmem %s0, %s170
      %s172 = smul.u32 2, %s19
      %p173 = scmp.lt.s32.totalorder %s18, 1
      %s174 = scalar_select %p173, %s18, 1
      %s175 = smul.addr %s174, 8
      %s176 = scalar_lea.vmem %s1, %s175
      %p177 = scmp.lt.s32.totalorder %s18, 1
      %s178 = scalar_select %p177, %s18, 1
      %s179 = smul.addr %s178, 8
      %s180 = scalar_lea.vmem %s2, %s179
      %p182 = scmp.eq.s32.totalorder %s19, 0
      // Predicated region
      $region25: #{mose_loss.2} parent=23 // pred_check
        %p183 = pneg %p182
      $region26: #{mose_loss.2} parent=23 // pred_check_branch
        %185 = sbr.rel (%p183) target = $region28
      $region27: #{mose_loss.2} parent=23 // pred_region
        %vm186 = vcmask 64512
        %187 = vst.msk [vmem:[%s176] sm:$0xff] %vm186, 0.0
        %vm188 = vcmask 7168
        %189 = vst.msk [vmem:[%s180] sm:$0xff] %vm188, 0.0
      $region28: #{mose_loss.2} parent=23 // pred_fallthru
        _
      %v190 = vld [vmem:[%s171] sm:$0xff]
      %v191 = vld [vmem:[%s176] sm:$0xff]
      %v193 = vunpack.c.l.b16 %v190
      %v194 = vunpack.c.h.b16 %v190
      %v195 = vpack.c.b16 %v193, %v193
      %v196 = vpack.c.b16 %v194, %v194
      %199 = vmatprep.subr.bf16.mxu0 %v196
      %200 = vmatpush1.bf16.xpose.msra.mxu0 %v195
      %201 = vmatprep.subr.bf16.mxu0 0
      %202 = vmatpush1.bf16.xpose.msra.mxu0 0
      %203 = vmatprep.subr.bf16.mxu0 0
      %204 = vmatpush1.bf16.xpose.msra.mxu0 0
      %205 = vmatprep.subr.bf16.mxu0 0
      %206 = vmatpush1.bf16.xpose.msra.mxu0 0
      %207 = vmatprep.subr.bf16.mxu0 0
      %208 = vmatpush1.bf16.xpose.msra.mxu0 0
      %209 = vmatprep.subr.bf16.mxu0 0
      %210 = vmatpush1.bf16.xpose.msra.mxu0 0
      %211 = vmatprep.subr.bf16.mxu0 0
      %212 = vmatpush1.bf16.xpose.msra.mxu0 0
      %213 = vmatprep.subr.bf16.mxu0 0
      %214 = vmatpush1.bf16.xpose.msra.mxu0 0
      %215 = vmatprep.subr.bf16.mxu0 0
      %216 = vmatpush1.bf16.xpose.msra.mxu0 0
      %217 = vmatprep.subr.bf16.mxu0 0
      %218 = vmatpush1.bf16.xpose.msra.mxu0 0
      %219 = vmatprep.subr.bf16.mxu0 0
      %220 = vmatpush1.bf16.xpose.msra.mxu0 0
      %221 = vmatprep.subr.bf16.mxu0 0
      %222 = vmatpush1.bf16.xpose.msra.mxu0 0
      %223 = vmatprep.subr.bf16.mxu0 0
      %224 = vmatpush1.bf16.xpose.msra.mxu0 0
      %225 = vmatprep.subr.bf16.mxu0 0
      %226 = vmatpush1.bf16.xpose.msra.mxu0 0
      %227 = vmatprep.subr.bf16.mxu0 0
      %228 = vmatpush1.bf16.xpose.msra.mxu0 0
      %229 = vmatprep.subr.bf16.mxu0 0
      %230 = vmatpush1.bf16.xpose.msra.mxu0 0
      %231 = vmatprep.mubr.bf16.mxu0 %v196
      %232 = vmatmul.mubr.bf16.gmra.mrb[0].mxu0 %v195
      %v233 = vpop.f32.mrb[0].mxu0
      %v234 = vadd.f32 0.0, %v233
      %v235 = vpop.f32.mrb[0].mxu0
      %v236 = vpop.f32.mrb[0].mxu0
      %v237 = vpop.f32.mrb[0].mxu0
      %238 = vdwg.mxu0
      %v239 = vadd.f32 %v191, %v234
      %vm240 = vcmask 64512
      %241 = vst.msk [vmem:[%s176] sm:$0xff] %vm240, %v239
      %v242 = vld [vmem:[%s180] sm:$0xff]
      %v243 = vunpack.c.l.bf16 %v190
      %v244 = vunpack.c.h.bf16 %v190
      %v245 = vadd.f32 %v243, %v244
      %246 = vadd.xlane.f32.xlu0 %v245
      %v247 = vpop.xlane.xlu0 %246
      %v248 = vadd.f32 %v242, %v247
      %vm249 = vcmask 7168
      %250 = vst.msk [vmem:[%s180] sm:$0xff] %vm249, %v248
      %p251 = scmp.lt.s32.totalorder %s18, 1
      %s252 = scalar_select %p251, %s18, 1
      %s253 = smul.addr %s252, 8
      %s254 = scalar_lea.vmem %s1, %s253
      %p255 = scmp.lt.s32.totalorder %s18, 1
      %s256 = scalar_select %p255, %s18, 1
      %s257 = smul.addr %s256, 8
      %s258 = scalar_lea.vmem %s2, %s257
      // Predicated region
      $region29: #{mose_loss.2} parent=23 // pred_check
        %p259 = pneg %p72
      $region30: #{mose_loss.2} parent=23 // pred_check_branch
        %261 = sbr.rel (%p259) target = $region32
      $region31: #{mose_loss.2} parent=23 // pred_region
        _
      $region32: #{mose_loss.2} parent=23 // pred_fallthru
        _
      // Predicated region
      $region33: #{mose_loss.2} parent=23 // pred_check
        %p262 = pneg %p98
      $region34: #{mose_loss.2} parent=23 // pred_check_branch
        %264 = sbr.rel (%p262) target = $region36
      $region35: #{mose_loss.2} parent=23 // pred_region
        _
      $region36: #{mose_loss.2} parent=23 // pred_fallthru
        _
    $region24: #{mose_loss.2} parent=5 // pred_fallthru
      _
    %p265 = scmp.le.s32.totalorder 2, %s9
    // Predicated region
    $region37: #{mose_loss.2} parent=5 // pred_check
      %p266 = pneg %p265
    $region38: #{mose_loss.2} parent=5 // pred_check_branch
      %268 = sbr.rel (%p266) target = $region40
    $region39: #{mose_loss.2} parent=5 // pred_region
      %s269 = ssub.s32 %s9, 2
      // Predicated region
      $region41: #{mose_loss.2} parent=39 // pred_check
        %p270 = pneg %p78
      $region42: #{mose_loss.2} parent=39 // pred_check_branch
        %272 = sbr.rel (%p270) target = $region44
      $region43: #{mose_loss.2} parent=39 // pred_region
        %p273 = scmp.lt.s32.totalorder %s20, 1
        %s274 = scalar_select %p273, %s20, 1
        %s275 = smul.addr %s274, 8
        %s276 = scalar_lea.vmem %s1, %s275
      $region44: #{mose_loss.2} parent=39 // pred_fallthru
        _
      // Predicated region
      $region45: #{mose_loss.2} parent=39 // pred_check
        %p277 = pneg %p104
      $region46: #{mose_loss.2} parent=39 // pred_check_branch
        %279 = sbr.rel (%p277) target = $region48
      $region47: #{mose_loss.2} parent=39 // pred_region
        %p280 = scmp.lt.s32.totalorder %s20, 1
        %s281 = scalar_select %p280, %s20, 1
        %s282 = smul.addr %s281, 8
        %s283 = scalar_lea.vmem %s2, %s282
      $region48: #{mose_loss.2} parent=39 // pred_fallthru
        _
    $region40: #{mose_loss.2} parent=5 // pred_fallthru
      _
  $region6: #{mose_loss.2} parent=0 // loop_footer
    %s13 = sadd.s32 1, %s9
  $region7: #{mose_loss.2} parent=0 // loop_footer_branch
    %8 = sbr.rel target = $region3
  $region8: #{mose_loss.2} parent=0 // loop_exit
    _

// kernel: mose_loss.3
$region0: #{mose_loss.3}
  #allocation0 [shape = 'u32[]', space=smem, size = 0x4, offset = 0x4, fixed_abs, tag = 'smem constant byte address 0x4 - core index']
  #allocation1 [shape = 'u32[144,128]{1,0:T(1,128)}', space=vmem, size = 0x12000, scoped, tag = 'internal scratch']
  %s0 = inlined_call_operand.vmem [shape: bf16[2,8,256], index: 0, kind: input, shape index: {}]
  %s1 = inlined_call_operand.vmem [shape: bf16[16,8], index: 1, kind: input, shape index: {}]
  %s2 = inlined_call_operand.vmem [shape: f32[16,1], index: 2, kind: input, shape index: {}]
  %s3 = inlined_call_operand.vmem [shape: f32[16,1], index: 3, kind: input, shape index: {}]
  %s4 = inlined_call_operand.vmem [shape: bf16[256,1024], index: 4, kind: input, shape index: {}]
  %s5 = inlined_call_operand.vmem [shape: bf16[2,16,1024], index: 5, kind: input, shape index: {}]
  %s6 = inlined_call_operand.vmem [shape: f32[2,1,1,1024], index: 6, kind: output, shape index: {}]
  %s7 = sld [smem:[#allocation0]]
  $region61: #{mose_loss.3} parent=0
    _
  %s9 = ssub.s32 1, %s7
  %s10 = scalar_select 0, %s9, %s7
  loop: start=0, step=1, limit=4
  $region2: #{mose_loss.3} parent=0 // loop_pre_header
    _
  $region3: #{mose_loss.3} parent=0 // loop_header
    %s12 = sphi 0, %s16
    %p13 = scmp.ge.s32.totalorder %s12, 4
    %s19 = sphi 0, %s38
    %s20 = sphi 0, %s34
    %s21 = sphi 0, %s30
    %s22 = sphi 0, %s19
    %s23 = sphi 0, %s20
    %s24 = sphi 0, %s21
    %s25 = sphi 0, %s22
    %s26 = sphi 0, %s23
    %s27 = sphi 0, %s24
    %s41 = sphi 0, %s43
    %s44 = sphi 0, %s41
    %s45 = sphi 0, %s44
    %s61 = sphi 0, %s45
    %s69 = sphi 0, %s71
    %s72 = sphi 0, %s69
    %s73 = sphi 0, %s72
    %s89 = sphi 0, %s73
    %s97 = sphi 0, %s99
    %s100 = sphi 0, %s97
    %s101 = sphi 0, %s100
    %s117 = sphi 0, %s101
    %s125 = sphi 0, %s127
    %s128 = sphi 0, %s125
    %s129 = sphi 0, %s128
    %s145 = sphi 0, %s129
    %s149 = sphi 0, %s149
    %s151 = sphi 0, %s149
    %s152 = sphi 0, %s151
    %s166 = sphi 0, %s152
    %s176 = sphi 0, %s178
    %s179 = sphi 0, %s176
    %s180 = sphi 0, %s179
    %s196 = sphi 0, %s180
    %s204 = sphi 0, %s206
    %s207 = sphi 0, %s204
    %s208 = sphi 0, %s207
    %s224 = sphi 0, %s208
  $region4: #{mose_loss.3} parent=0 // loop_header_branch
    %15 = sbr.rel (%p13) target = $region8
  $region5: #{mose_loss.3} parent=0 // loop_body
    %s17 = ssub.s32 %s12, 1
    %s18 = ssub.s32 %s12, 2
    %s28 = sadd.s32 1, %s21
    %p29 = scmp.ge.s32.totalorder %s28, 1
    %s30 = scalar_select %p29, 0, %s28
    %s31 = sadd.s32 1, %s20
    %s32 = scalar_select %p29, %s31, %s20
    %p33 = scmp.ge.s32.totalorder %s32, 1
    %s34 = scalar_select %p33, 0, %s32
    %s35 = sadd.s32 1, %s19
    %s36 = scalar_select %p33, %s35, %s19
    %p37 = scmp.ge.s32.totalorder %s36, 2
    %s38 = scalar_select %p37, 0, %s36
    %s39 = ssub.s32 %s19, %s38
    %p40 = scmp.eq.s32.totalorder %s39, 0
    %s42 = sadd.s32 %s41, 1
    %s43 = scalar_select %p40, %s41, %s42
    %p46 = pneg %p40
    %p47 = scmp.eq.s32.totalorder %s12, 1
    %p48 = por %p46, %p47
    %p49 = scmp.ne.s32.totalorder %s41, %s44
    %p50 = scmp.eq.s32.totalorder %s12, 0
    %p51 = por %p49, %p50
    %p52 = scmp.ne.s32.totalorder %s41, %s44
    %p53 = scmp.eq.s32.totalorder %s17, 1
    %p54 = por %p52, %p53
    %p55 = scmp.ne.s32.totalorder %s44, %s45
    %p56 = scmp.eq.s32.totalorder %s17, 0
    %p57 = por %p55, %p56
    %p58 = scmp.ne.s32.totalorder %s44, %s45
    %p59 = scmp.eq.s32.totalorder %s18, 1
    %p60 = por %p58, %p59
    %p62 = scmp.ne.s32.totalorder %s45, %s61
    %p63 = scmp.eq.s32.totalorder %s18, 0
    %p64 = por %p62, %p63
    %s65 = sadd.s32 %s20, %s21
    %s66 = sadd.s32 %s34, %s30
    %s67 = ssub.s32 %s65, %s66
    %p68 = scmp.eq.s32.totalorder %s67, 0
    %s70 = sadd.s32 %s69, 1
    %s71 = scalar_select %p68, %s69, %s70
    %p74 = pneg %p68
    %p75 = scmp.eq.s32.totalorder %s12, 1
    %p76 = por %p74, %p75
    %p77 = scmp.ne.s32.totalorder %s69, %s72
    %p78 = scmp.eq.s32.totalorder %s12, 0
    %p79 = por %p77, %p78
    %p80 = scmp.ne.s32.totalorder %s69, %s72
    %p81 = scmp.eq.s32.totalorder %s17, 1
    %p82 = por %p80, %p81
    %p83 = scmp.ne.s32.totalorder %s72, %s73
    %p84 = scmp.eq.s32.totalorder %s17, 0
    %p85 = por %p83, %p84
    %p86 = scmp.ne.s32.totalorder %s72, %s73
    %p87 = scmp.eq.s32.totalorder %s18, 1
    %p88 = por %p86, %p87
    %p90 = scmp.ne.s32.totalorder %s73, %s89
    %p91 = scmp.eq.s32.totalorder %s18, 0
    %p92 = por %p90, %p91
    %s93 = sadd.s32 %s20, %s21
    %s94 = sadd.s32 %s34, %s30
    %s95 = ssub.s32 %s93, %s94
    %p96 = scmp.eq.s32.totalorder %s95, 0
    %s98 = sadd.s32 %s97, 1
    %s99 = scalar_select %p96, %s97, %s98
    %p102 = pneg %p96
    %p103 = scmp.eq.s32.totalorder %s12, 1
    %p104 = por %p102, %p103
    %p105 = scmp.ne.s32.totalorder %s97, %s100
    %p106 = scmp.eq.s32.totalorder %s12, 0
    %p107 = por %p105, %p106
    %p108 = scmp.ne.s32.totalorder %s97, %s100
    %p109 = scmp.eq.s32.totalorder %s17, 1
    %p110 = por %p108, %p109
    %p111 = scmp.ne.s32.totalorder %s100, %s101
    %p112 = scmp.eq.s32.totalorder %s17, 0
    %p113 = por %p111, %p112
    %p114 = scmp.ne.s32.totalorder %s100, %s101
    %p115 = scmp.eq.s32.totalorder %s18, 1
    %p116 = por %p114, %p115
    %p118 = scmp.ne.s32.totalorder %s101, %s117
    %p119 = scmp.eq.s32.totalorder %s18, 0
    %p120 = por %p118, %p119
    %s121 = sadd.s32 %s20, %s21
    %s122 = sadd.s32 %s34, %s30
    %s123 = ssub.s32 %s121, %s122
    %p124 = scmp.eq.s32.totalorder %s123, 0
    %s126 = sadd.s32 %s125, 1
    %s127 = scalar_select %p124, %s125, %s126
    %p130 = pneg %p124
    %p131 = scmp.eq.s32.totalorder %s12, 1
    %p132 = por %p130, %p131
    %p133 = scmp.ne.s32.totalorder %s125, %s128
    %p134 = scmp.eq.s32.totalorder %s12, 0
    %p135 = por %p133, %p134
    %p136 = scmp.ne.s32.totalorder %s125, %s128
    %p137 = scmp.eq.s32.totalorder %s17, 1
    %p138 = por %p136, %p137
    %p139 = scmp.ne.s32.totalorder %s128, %s129
    %p140 = scmp.eq.s32.totalorder %s17, 0
    %p141 = por %p139, %p140
    %p142 = scmp.ne.s32.totalorder %s128, %s129
    %p143 = scmp.eq.s32.totalorder %s18, 1
    %p144 = por %p142, %p143
    %p146 = scmp.ne.s32.totalorder %s129, %s145
    %p147 = scmp.eq.s32.totalorder %s18, 0
    %p148 = por %p146, %p147
    %s150 = sadd.s32 %s149, 1
    %p153 = scmp.eq.s32.totalorder %s12, 1
    %p154 = scmp.ne.s32.totalorder %s149, %s151
    %p155 = scmp.eq.s32.totalorder %s12, 0
    %p156 = por %p154, %p155
    %p157 = scmp.ne.s32.totalorder %s149, %s151
    %p158 = scmp.eq.s32.totalorder %s17, 1
    %p159 = por %p157, %p158
    %p160 = scmp.ne.s32.totalorder %s151, %s152
    %p161 = scmp.eq.s32.totalorder %s17, 0
    %p162 = por %p160, %p161
    %p163 = scmp.ne.s32.totalorder %s151, %s152
    %p164 = scmp.eq.s32.totalorder %s18, 1
    %p165 = por %p163, %p164
    %p167 = scmp.ne.s32.totalorder %s152, %s166
    %p168 = scmp.eq.s32.totalorder %s18, 0
    %p169 = por %p167, %p168
    %s170 = sadd.s32 %s20, %s21
    %s171 = sadd.s32 %s34, %s30
    %s172 = ssub.s32 %s19, %s38
    %s173 = ssub.s32 %s170, %s171
    %s174 = sor.u32 %s172, %s173
    %p175 = scmp.eq.s32.totalorder %s174, 0
    %s177 = sadd.s32 %s176, 1
    %s178 = scalar_select %p175, %s176, %s177
    %p181 = pneg %p175
    %p182 = scmp.eq.s32.totalorder %s12, 1
    %p183 = por %p181, %p182
    %p184 = scmp.ne.s32.totalorder %s176, %s179
    %p185 = scmp.eq.s32.totalorder %s12, 0
    %p186 = por %p184, %p185
    %p187 = scmp.ne.s32.totalorder %s176, %s179
    %p188 = scmp.eq.s32.totalorder %s17, 1
    %p189 = por %p187, %p188
    %p190 = scmp.ne.s32.totalorder %s179, %s180
    %p191 = scmp.eq.s32.totalorder %s17, 0
    %p192 = por %p190, %p191
    %p193 = scmp.ne.s32.totalorder %s179, %s180
    %p194 = scmp.eq.s32.totalorder %s18, 1
    %p195 = por %p193, %p194
    %p197 = scmp.ne.s32.totalorder %s180, %s196
    %p198 = scmp.eq.s32.totalorder %s18, 0
    %p199 = por %p197, %p198
    %s200 = ssub.s32 %s19, %s38
    %s201 = ssub.s32 %s20, %s34
    %s202 = sor.u32 %s200, %s201
    %p203 = scmp.eq.s32.totalorder %s202, 0
    %s205 = sadd.s32 %s204, 1
    %s206 = scalar_select %p203, %s204, %s205
    %p209 = pneg %p203
    %p210 = scmp.eq.s32.totalorder %s12, 1
    %p211 = por %p209, %p210
    %p212 = scmp.ne.s32.totalorder %s204, %s207
    %p213 = scmp.eq.s32.totalorder %s12, 0
    %p214 = por %p212, %p213
    %p215 = scmp.ne.s32.totalorder %s204, %s207
    %p216 = scmp.eq.s32.totalorder %s17, 1
    %p217 = por %p215, %p216
    %p218 = scmp.ne.s32.totalorder %s207, %s208
    %p219 = scmp.eq.s32.totalorder %s17, 0
    %p220 = por %p218, %p219
    %p221 = scmp.ne.s32.totalorder %s207, %s208
    %p222 = scmp.eq.s32.totalorder %s18, 1
    %p223 = por %p221, %p222
    %p225 = scmp.ne.s32.totalorder %s208, %s224
    %p226 = scmp.eq.s32.totalorder %s18, 0
    %p227 = por %p225, %p226
    %p228 = scmp.le.s32.totalorder 1, %s12
    %p229 = scmp.lt.s32.totalorder %s12, 3
    %p230 = pnand %p228, %p229
    %p231 = pneg %p230
    // Predicated region
    $region9: #{mose_loss.3} parent=5 // pred_check
      _
    $region10: #{mose_loss.3} parent=5 // pred_check_branch
      %233 = sbr.rel (%p230) target = $region12
    $region11: #{mose_loss.3} parent=5 // pred_region
      %s234 = ssub.s32 %s12, 1
      // Predicated region
      $region13: #{mose_loss.3} parent=11 // pred_check
        %p235 = pneg %p85
      $region14: #{mose_loss.3} parent=11 // pred_check_branch
        %237 = sbr.rel (%p235) target = $region16
      $region15: #{mose_loss.3} parent=11 // pred_region
        %s238 = sadd.s32 %s23, %s24
        %s239 = smul.u32 2, %s238
        %p240 = scmp.lt.s32.totalorder %s239, 1
        %s241 = scalar_select %p240, %s239, 1
        %s242 = smul.addr %s241, 4
        %s243 = scalar_lea.vmem %s1, %s242
        %s244 = sadd.s32 %s23, %s24
        %s245 = smul.u32 2, %s244
      $region16: #{mose_loss.3} parent=11 // pred_fallthru
        _
      // Predicated region
      $region17: #{mose_loss.3} parent=11 // pred_check
        %p246 = pneg %p113
      $region18: #{mose_loss.3} parent=11 // pred_check_branch
        %248 = sbr.rel (%p246) target = $region20
      $region19: #{mose_loss.3} parent=11 // pred_region
        %s249 = sadd.s32 %s23, %s24
        %s250 = smul.u32 2, %s249
        %p251 = scmp.lt.s32.totalorder %s250, 1
        %s252 = scalar_select %p251, %s250, 1
        %s253 = smul.addr %s252, 8
        %s254 = scalar_lea.vmem %s2, %s253
        %s255 = sadd.s32 %s23, %s24
        %s256 = smul.u32 2, %s255
      $region20: #{mose_loss.3} parent=11 // pred_fallthru
        _
      // Predicated region
      $region21: #{mose_loss.3} parent=11 // pred_check
        %p257 = pneg %p141
      $region22: #{mose_loss.3} parent=11 // pred_check_branch
        %259 = sbr.rel (%p257) target = $region24
      $region23: #{mose_loss.3} parent=11 // pred_region
        %s260 = sadd.s32 %s23, %s24
        %s261 = smul.u32 2, %s260
        %p262 = scmp.lt.s32.totalorder %s261, 1
        %s263 = scalar_select %p262, %s261, 1
        %s264 = smul.addr %s263, 8
        %s265 = scalar_lea.vmem %s3, %s264
        %s266 = sadd.s32 %s23, %s24
        %s267 = smul.u32 2, %s266
      $region24: #{mose_loss.3} parent=11 // pred_fallthru
        _
      // Predicated region
      $region25: #{mose_loss.3} parent=11 // pred_check
        %p268 = pneg %p162
      $region26: #{mose_loss.3} parent=11 // pred_check_branch
        %270 = sbr.rel (%p268) target = $region28
      $region27: #{mose_loss.3} parent=11 // pred_region
        _
      $region28: #{mose_loss.3} parent=11 // pred_fallthru
        _
    $region12: #{mose_loss.3} parent=5 // pred_fallthru
      _
    %p271 = scmp.lt.s32.totalorder %s12, 2
    // Predicated region
    $region29: #{mose_loss.3} parent=5 // pred_check
      %p272 = pneg %p271
    $region30: #{mose_loss.3} parent=5 // pred_check_branch
      %274 = sbr.rel (%p272) target = $region32
    $region31: #{mose_loss.3} parent=5 // pred_region
      // Predicated region
      $region33: #{mose_loss.3} parent=31 // pred_check
        %p275 = pneg %p51
      $region34: #{mose_loss.3} parent=31 // pred_check_branch
        %277 = sbr.rel (%p275) target = $region36
      $region35: #{mose_loss.3} parent=31 // pred_region
        %p278 = scmp.lt.s32.totalorder %s19, 1
        %s279 = scalar_select %p278, %s19, 1
        %s280 = smul.addr %s279, 2
        %s281 = smul.addr %s280, 4
        %s282 = scalar_lea.vmem %s0, %s281
      $region36: #{mose_loss.3} parent=31 // pred_fallthru
        _
      // Predicated region
      $region37: #{mose_loss.3} parent=31 // pred_check
        %p283 = pneg %p186
      $region38: #{mose_loss.3} parent=31 // pred_check_branch
        %285 = sbr.rel (%p283) target = $region40
      $region39: #{mose_loss.3} parent=31 // pred_region
        %s286 = sadd.s32 %s20, %s21
        %s287 = smul.u32 2, %s286
        %p288 = scmp.lt.s32.totalorder %s19, 1
        %s289 = scalar_select %p288, %s19, 1
        %p290 = scmp.lt.s32.totalorder %s287, 1
        %s291 = scalar_select %p290, %s287, 1
        %s292 = smul.addr %s291, 8
        %s293 = smul.addr %s289, 16
        %s294 = sadd.s32 %s292, %s293
        %s295 = smul.addr %s294, 4
        %s296 = scalar_lea.vmem %s5, %s295
        %s297 = sadd.s32 %s20, %s21
        %s298 = smul.u32 2, %s297
      $region40: #{mose_loss.3} parent=31 // pred_fallthru
        _
    $region32: #{mose_loss.3} parent=5 // pred_fallthru
      _
    %p299 = scmp.le.s32.totalorder 1, %s12
    %p300 = scmp.lt.s32.totalorder %s12, 3
    %p301 = pnand %p299, %p300
    %p302 = pneg %p301
    // Predicated region
    $region41: #{mose_loss.3} parent=5 // pred_check
      _
    $region42: #{mose_loss.3} parent=5 // pred_check_branch
      %304 = sbr.rel (%p301) target = $region44
    $region43: #{mose_loss.3} parent=5 // pred_region
      %s305 = ssub.s32 %s12, 1
      %p306 = scmp.lt.s32.totalorder %s22, 1
      %s307 = scalar_select %p306, %s22, 1
      %s308 = smul.addr %s307, 2
      %s309 = smul.addr %s308, 4
      %s310 = scalar_lea.vmem %s0, %s309
      %p311 = pneg %p57
      %p312 = pneg %p54
      %s313 = sadd.s32 %s23, %s24
      %s314 = smul.u32 2, %s313
      %p315 = scmp.lt.s32.totalorder %s314, 1
      %s316 = scalar_select %p315, %s314, 1
      %s317 = smul.addr %s316, 4
      %s318 = scalar_lea.vmem %s1, %s317
      %p319 = pneg %p85
      %p320 = pneg %p82
      %s321 = sadd.s32 %s23, %s24
      %s322 = smul.u32 2, %s321
      %p323 = scmp.lt.s32.totalorder %s322, 1
      %s324 = scalar_select %p323, %s322, 1
      %s325 = smul.addr %s324, 8
      %s326 = scalar_lea.vmem %s2, %s325
      %p327 = pneg %p113
      %p328 = pneg %p110
      %s329 = sadd.s32 %s23, %s24
      %s330 = smul.u32 2, %s329
      %p331 = scmp.lt.s32.totalorder %s330, 1
      %s332 = scalar_select %p331, %s330, 1
      %s333 = smul.addr %s332, 8
      %s334 = scalar_lea.vmem %s3, %s333
      %p335 = pneg %p141
      %p336 = pneg %p138
      %p337 = pneg %p162
      %p338 = pneg %p159
      %s339 = sadd.s32 %s23, %s24
      %s340 = smul.u32 2, %s339
      %p341 = scmp.lt.s32.totalorder %s22, 1
      %s342 = scalar_select %p341, %s22, 1
      %p343 = scmp.lt.s32.totalorder %s340, 1
      %s344 = scalar_select %p343, %s340, 1
      %s345 = smul.addr %s344, 8
      %s346 = smul.addr %s342, 16
      %s347 = sadd.s32 %s345, %s346
      %s348 = smul.addr %s347, 4
      %s349 = scalar_lea.vmem %s5, %s348
      %p350 = pneg %p192
      %p351 = pneg %p189
      %p352 = pneg %p220
      %p353 = pneg %p217
      %p354 = scmp.lt.s32.totalorder %s22, 1
      %s355 = scalar_select %p354, %s22, 1
      %p356 = scmp.lt.s32.totalorder %s23, 0
      %s357 = scalar_select %p356, %s23, 0
      %s358 = smul.addr %s357, 8
      %s359 = smul.addr %s355, 8
      %s360 = sadd.s32 %s358, %s359
      %s361 = scalar_lea.vmem %s6, %s360
      %p362 = scmp.lt.s32.totalorder %s22, 1
      %s363 = scalar_select %p362, %s22, 1
      %s364 = smul.addr %s363, 2
      %s365 = smul.addr %s364, 4
      %s366 = scalar_lea.vmem %s0, %s365
      %s367 = sadd.s32 %s23, %s24
      %s368 = smul.u32 2, %s367
      %p369 = scmp.lt.s32.totalorder %s368, 1
      %s370 = scalar_select %p369, %s368, 1
      %s371 = smul.addr %s370, 4
      %s372 = scalar_lea.vmem %s1, %s371
      %s373 = sadd.s32 %s23, %s24
      %s374 = smul.u32 2, %s373
      %s375 = sadd.s32 %s23, %s24
      %s376 = smul.u32 2, %s375
      %p377 = scmp.lt.s32.totalorder %s376, 1
      %s378 = scalar_select %p377, %s376, 1
      %s379 = smul.addr %s378, 8
      %s380 = scalar_lea.vmem %s2, %s379
      %s381 = sadd.s32 %s23, %s24
      %s382 = smul.u32 2, %s381
      %s383 = sadd.s32 %s23, %s24
      %s384 = smul.u32 2, %s383
      %p385 = scmp.lt.s32.totalorder %s384, 1
      %s386 = scalar_select %p385, %s384, 1
      %s387 = smul.addr %s386, 8
      %s388 = scalar_lea.vmem %s3, %s387
      %s389 = sadd.s32 %s23, %s24
      %s390 = smul.u32 2, %s389
      %s391 = sadd.s32 %s23, %s24
      %s392 = smul.u32 2, %s391
      %p393 = scmp.lt.s32.totalorder %s22, 1
      %s394 = scalar_select %p393, %s22, 1
      %p395 = scmp.lt.s32.totalorder %s392, 1
      %s396 = scalar_select %p395, %s392, 1
      %s397 = smul.addr %s396, 8
      %s398 = smul.addr %s394, 16
      %s399 = sadd.s32 %s397, %s398
      %s400 = smul.addr %s399, 4
      %s401 = scalar_lea.vmem %s5, %s400
      %s402 = sadd.s32 %s23, %s24
      %s403 = smul.u32 2, %s402
      %p404 = scmp.lt.s32.totalorder %s22, 1
      %s405 = scalar_select %p404, %s22, 1
      %p406 = scmp.lt.s32.totalorder %s23, 0
      %s407 = scalar_select %p406, %s23, 0
      %s408 = smul.addr %s407, 8
      %s409 = smul.addr %s405, 8
      %s410 = sadd.s32 %s408, %s409
      %s411 = scalar_lea.vmem %s6, %s410
      %p413 = scmp.eq.s32.totalorder %s24, 0
      // Predicated region
      $region45: #{mose_loss.3} parent=43 // pred_check
        %p414 = pneg %p413
      $region46: #{mose_loss.3} parent=43 // pred_check_branch
        %416 = sbr.rel (%p414) target = $region48
      $region47: #{mose_loss.3} parent=43 // pred_region
        %417 = vst [vmem:[%s411] sm:$0xff] 0.0
      $region48: #{mose_loss.3} parent=43 // pred_fallthru
        _
      %v418 = vld [vmem:[%s372] sm:$0xf]
      %v419 = vld [vmem:[%s372 + $0x4] sm:$0xf]
      %v420 = vld [vmem:[%s366] sm:$0xff]
      %v423 = vunpack.c.l.b16 %v418
      %v424 = vunpack.c.l.b16 %v419
      %v425 = vpack.c.b16 %v424, %v423
      %v427 = vunpack.c.l.b16 %v420
      %v428 = vunpack.c.h.b16 %v420
      %v429 = vpack.c.b16 %v427, %v427
      %v430 = vpack.c.b16 %v428, %v428
      %vm431 = vcmask 64512
      %v433 = vsel %vm431, %v425, 0
      %vm435 = vcmask 1043456
      %v437 = vsel %vm435, %v429, 0
      %v440 = vsel %vm435, %v430, 0
      %442 = vmatprep.subr.bf16.mxu0 %v440
      %443 = vmatpush1.bf16.msra.mxu0 %v437
      %444 = vmatprep.subr.bf16.mxu0 0
      %445 = vmatpush1.bf16.msra.mxu0 0
      %446 = vmatprep.subr.bf16.mxu0 0
      %447 = vmatpush1.bf16.msra.mxu0 0
      %448 = vmatprep.subr.bf16.mxu0 0
      %449 = vmatpush1.bf16.msra.mxu0 0
      %450 = vmatprep.subr.bf16.mxu0 0
      %451 = vmatpush1.bf16.msra.mxu0 0
      %452 = vmatprep.subr.bf16.mxu0 0
      %453 = vmatpush1.bf16.msra.mxu0 0
      %454 = vmatprep.subr.bf16.mxu0 0
      %455 = vmatpush1.bf16.msra.mxu0 0
      %456 = vmatprep.subr.bf16.mxu0 0
      %457 = vmatpush1.bf16.msra.mxu0 0
      %458 = vmatprep.subr.bf16.mxu0 0
      %459 = vmatpush1.bf16.msra.mxu0 0
      %460 = vmatprep.subr.bf16.mxu0 0
      %461 = vmatpush1.bf16.msra.mxu0 0
      %462 = vmatprep.subr.bf16.mxu0 0
      %463 = vmatpush1.bf16.msra.mxu0 0
      %464 = vmatprep.subr.bf16.mxu0 0
      %465 = vmatpush1.bf16.msra.mxu0 0
      %466 = vmatprep.subr.bf16.mxu0 0
      %467 = vmatpush1.bf16.msra.mxu0 0
      %468 = vmatprep.subr.bf16.mxu0 0
      %469 = vmatpush1.bf16.msra.mxu0 0
      %470 = vmatprep.subr.bf16.mxu0 0
      %471 = vmatpush1.bf16.msra.mxu0 0
      %472 = vmatprep.subr.bf16.mxu0 0
      %473 = vmatpush1.bf16.msra.mxu0 0
      %474 = vmatprep.mubr.bf16.mxu0 0
      %475 = vmatmul.mubr.bf16.gmra.mrb[0].mxu0 %v433
      %v476 = vpop.f32.mrb[0].mxu0
      %v477 = vadd.f32 0.0, %v476
      %v478 = vpop.f32.mrb[0].mxu0
      %v479 = vadd.f32 0.0, %v478
      %v480 = vpop.f32.mrb[0].mxu0
      %v481 = vadd.f32 0.0, %v480
      %v482 = vpop.f32.mrb[0].mxu0
      %v483 = vadd.f32 0.0, %v482
      %484 = vdwg.mxu0
      %v485 = vld [vmem:[%s380] sm:$0xff]
      %v486 = vld [vmem:[%s380 + $0x8] sm:$0xff]
      %488 = vset.pattern.permute.xlu0 0
      %489 = vperm.xlu0 %488, %v485
      %v490 = vpop.permute.xlu0 %489
      %493 = vset.pattern.permute.xlu0 0
      %494 = vperm.xlu0 %493, %v486
      %v495 = vpop.permute.xlu0 %494
      %v497 = vmul.f32 %v477, %v490
      %v498 = vmul.f32 %v479, %v490
      %v499 = vmul.f32 %v481, %v495
      %v500 = vmul.f32 %v483, %v495
      %v501 = vld [vmem:[%s388] sm:$0xff]
      %v502 = vld [vmem:[%s388 + $0x8] sm:$0xff]
      %504 = vset.pattern.permute.xlu0 0
      %505 = vperm.xlu0 %504, %v501
      %v506 = vpop.permute.xlu0 %505
      %509 = vset.pattern.permute.xlu0 0
      %510 = vperm.xlu0 %509, %v502
      %v511 = vpop.permute.xlu0 %510
      %v513 = vadd.f32 %v497, %v506
      %v514 = vadd.f32 %v498, %v506
      %v515 = vadd.f32 %v499, %v511
      %v516 = vadd.f32 %v500, %v511
      %v517 = vmax.f32 %v513, 0.0
      %v518 = vmax.f32 %v514, 0.0
      %v519 = vmax.f32 %v515, 0.0
      %v520 = vmax.f32 %v516, 0.0
      %v521 = vpack.c.bf16 %v519, %v517
      %v522 = vpack.c.bf16 %v520, %v518
      %v523 = vld [vmem:[%s4] sm:$0xff]
      %v524 = vld [vmem:[%s4 + $0x8] sm:$0xff]
      %v525 = vld [vmem:[%s4 + $0x10] sm:$0xff]
      %v526 = vld [vmem:[%s4 + $0x18] sm:$0xff]
      %v527 = vld [vmem:[%s4 + $0x20] sm:$0xff]
      %v528 = vld [vmem:[%s4 + $0x28] sm:$0xff]
      %v529 = vld [vmem:[%s4 + $0x30] sm:$0xff]
      %v530 = vld [vmem:[%s4 + $0x38] sm:$0xff]
      %v531 = vld [vmem:[%s4 + $0x40] sm:$0xff]
      %v532 = vld [vmem:[%s4 + $0x48] sm:$0xff]
      %v533 = vld [vmem:[%s4 + $0x50] sm:$0xff]
      %v534 = vld [vmem:[%s4 + $0x58] sm:$0xff]
      %v535 = vld [vmem:[%s4 + $0x60] sm:$0xff]
      %v536 = vld [vmem:[%s4 + $0x68] sm:$0xff]
      %v537 = vld [vmem:[%s4 + $0x70] sm:$0xff]
      %v538 = vld [vmem:[%s4 + $0x78] sm:$0xff]
      %v539 = vld [vmem:[%s4 + $0x80] sm:$0xff]
      %v540 = vld [vmem:[%s4 + $0x88] sm:$0xff]
      %v541 = vld [vmem:[%s4 + $0x90] sm:$0xff]
      %v542 = vld [vmem:[%s4 + $0x98] sm:$0xff]
      %v543 = vld [vmem:[%s4 + $0xa0] sm:$0xff]
      %v544 = vld [vmem:[%s4 + $0xa8] sm:$0xff]
      %v545 = vld [vmem:[%s4 + $0xb0] sm:$0xff]
      %v546 = vld [vmem:[%s4 + $0xb8] sm:$0xff]
      %v547 = vld [vmem:[%s4 + $0xc0] sm:$0xff]
      %v548 = vld [vmem:[%s4 + $0xc8] sm:$0xff]
      %v549 = vld [vmem:[%s4 + $0xd0] sm:$0xff]
      %v550 = vld [vmem:[%s4 + $0xd8] sm:$0xff]
      %v551 = vld [vmem:[%s4 + $0xe0] sm:$0xff]
      %v552 = vld [vmem:[%s4 + $0xe8] sm:$0xff]
      %v553 = vld [vmem:[%s4 + $0xf0] sm:$0xff]
      %v554 = vld [vmem:[%s4 + $0xf8] sm:$0xff]
      %v555 = vld [vmem:[%s4 + $0x100] sm:$0xff]
      %v556 = vld [vmem:[%s4 + $0x108] sm:$0xff]
      %v557 = vld [vmem:[%s4 + $0x110] sm:$0xff]
      %v558 = vld [vmem:[%s4 + $0x118] sm:$0xff]
      %v559 = vld [vmem:[%s4 + $0x120] sm:$0xff]
      %v560 = vld [vmem:[%s4 + $0x128] sm:$0xff]
      %v561 = vld [vmem:[%s4 + $0x130] sm:$0xff]
      %v562 = vld [vmem:[%s4 + $0x138] sm:$0xff]
      %v563 = vld [vmem:[%s4 + $0x140] sm:$0xff]
      %v564 = vld [vmem:[%s4 + $0x148] sm:$0xff]
      %v565 = vld [vmem:[%s4 + $0x150] sm:$0xff]
      %v566 = vld [vmem:[%s4 + $0x158] sm:$0xff]
      %v567 = vld [vmem:[%s4 + $0x160] sm:$0xff]
      %v568 = vld [vmem:[%s4 + $0x168] sm:$0xff]
      %v569 = vld [vmem:[%s4 + $0x170] sm:$0xff]
      %v570 = vld [vmem:[%s4 + $0x178] sm:$0xff]
      %v571 = vld [vmem:[%s4 + $0x180] sm:$0xff]
      %v572 = vld [vmem:[%s4 + $0x188] sm:$0xff]
      %v573 = vld [vmem:[%s4 + $0x190] sm:$0xff]
      %v574 = vld [vmem:[%s4 + $0x198] sm:$0xff]
      %v575 = vld [vmem:[%s4 + $0x1a0] sm:$0xff]
      %v576 = vld [vmem:[%s4 + $0x1a8] sm:$0xff]
      %v577 = vld [vmem:[%s4 + $0x1b0] sm:$0xff]
      %v578 = vld [vmem:[%s4 + $0x1b8] sm:$0xff]
      %v579 = vld [vmem:[%s4 + $0x1c0] sm:$0xff]
      %v580 = vld [vmem:[%s4 + $0x1c8] sm:$0xff]
      %v581 = vld [vmem:[%s4 + $0x1d0] sm:$0xff]
      %v582 = vld [vmem:[%s4 + $0x1d8] sm:$0xff]
      %v583 = vld [vmem:[%s4 + $0x1e0] sm:$0xff]
      %v584 = vld [vmem:[%s4 + $0x1e8] sm:$0xff]
      %v585 = vld [vmem:[%s4 + $0x1f0] sm:$0xff]
      %v586 = vld [vmem:[%s4 + $0x1f8] sm:$0xff]
      %v587 = vld [vmem:[%s4 + $0x200] sm:$0xff]
      %v588 = vld [vmem:[%s4 + $0x208] sm:$0xff]
      %v589 = vld [vmem:[%s4 + $0x210] sm:$0xff]
      %v590 = vld [vmem:[%s4 + $0x218] sm:$0xff]
      %v591 = vld [vmem:[%s4 + $0x220] sm:$0xff]
      %v592 = vld [vmem:[%s4 + $0x228] sm:$0xff]
      %v593 = vld [vmem:[%s4 + $0x230] sm:$0xff]
      %v594 = vld [vmem:[%s4 + $0x238] sm:$0xff]
      %v595 = vld [vmem:[%s4 + $0x240] sm:$0xff]
      %v596 = vld [vmem:[%s4 + $0x248] sm:$0xff]
      %v597 = vld [vmem:[%s4 + $0x250] sm:$0xff]
      %v598 = vld [vmem:[%s4 + $0x258] sm:$0xff]
      %v599 = vld [vmem:[%s4 + $0x260] sm:$0xff]
      %v600 = vld [vmem:[%s4 + $0x268] sm:$0xff]
      %v601 = vld [vmem:[%s4 + $0x270] sm:$0xff]
      %v602 = vld [vmem:[%s4 + $0x278] sm:$0xff]
      %v603 = vld [vmem:[%s4 + $0x280] sm:$0xff]
      %v604 = vld [vmem:[%s4 + $0x288] sm:$0xff]
      %v605 = vld [vmem:[%s4 + $0x290] sm:$0xff]
      %v606 = vld [vmem:[%s4 + $0x298] sm:$0xff]
      %v607 = vld [vmem:[%s4 + $0x2a0] sm:$0xff]
      %v608 = vld [vmem:[%s4 + $0x2a8] sm:$0xff]
      %v609 = vld [vmem:[%s4 + $0x2b0] sm:$0xff]
      %v610 = vld [vmem:[%s4 + $0x2b8] sm:$0xff]
      %v611 = vld [vmem:[%s4 + $0x2c0] sm:$0xff]
      %v612 = vld [vmem:[%s4 + $0x2c8] sm:$0xff]
      %v613 = vld [vmem:[%s4 + $0x2d0] sm:$0xff]
      %v614 = vld [vmem:[%s4 + $0x2d8] sm:$0xff]
      %v615 = vld [vmem:[%s4 + $0x2e0] sm:$0xff]
      %v616 = vld [vmem:[%s4 + $0x2e8] sm:$0xff]
      %v617 = vld [vmem:[%s4 + $0x2f0] sm:$0xff]
      %v618 = vld [vmem:[%s4 + $0x2f8] sm:$0xff]
      %v619 = vld [vmem:[%s4 + $0x300] sm:$0xff]
      %v620 = vld [vmem:[%s4 + $0x308] sm:$0xff]
      %v621 = vld [vmem:[%s4 + $0x310] sm:$0xff]
      %v622 = vld [vmem:[%s4 + $0x318] sm:$0xff]
      %v623 = vld [vmem:[%s4 + $0x320] sm:$0xff]
      %v624 = vld [vmem:[%s4 + $0x328] sm:$0xff]
      %v625 = vld [vmem:[%s4 + $0x330] sm:$0xff]
      %v626 = vld [vmem:[%s4 + $0x338] sm:$0xff]
      %v627 = vld [vmem:[%s4 + $0x340] sm:$0xff]
      %v628 = vld [vmem:[%s4 + $0x348] sm:$0xff]
      %v629 = vld [vmem:[%s4 + $0x350] sm:$0xff]
      %v630 = vld [vmem:[%s4 + $0x358] sm:$0xff]
      %v631 = vld [vmem:[%s4 + $0x360] sm:$0xff]
      %v632 = vld [vmem:[%s4 + $0x368] sm:$0xff]
      %v633 = vld [vmem:[%s4 + $0x370] sm:$0xff]
      %v634 = vld [vmem:[%s4 + $0x378] sm:$0xff]
      %v635 = vld [vmem:[%s4 + $0x380] sm:$0xff]
      %v636 = vld [vmem:[%s4 + $0x388] sm:$0xff]
      %v637 = vld [vmem:[%s4 + $0x390] sm:$0xff]
      %v638 = vld [vmem:[%s4 + $0x398] sm:$0xff]
      %v639 = vld [vmem:[%s4 + $0x3a0] sm:$0xff]
      %v640 = vld [vmem:[%s4 + $0x3a8] sm:$0xff]
      %v641 = vld [vmem:[%s4 + $0x3b0] sm:$0xff]
      %v642 = vld [vmem:[%s4 + $0x3b8] sm:$0xff]
      %v643 = vld [vmem:[%s4 + $0x3c0] sm:$0xff]
      %v644 = vld [vmem:[%s4 + $0x3c8] sm:$0xff]
      %v645 = vld [vmem:[%s4 + $0x3d0] sm:$0xff]
      %v646 = vld [vmem:[%s4 + $0x3d8] sm:$0xff]
      %v647 = vld [vmem:[%s4 + $0x3e0] sm:$0xff]
      %v648 = vld [vmem:[%s4 + $0x3e8] sm:$0xff]
      %v649 = vld [vmem:[%s4 + $0x3f0] sm:$0xff]
      %v650 = vld [vmem:[%s4 + $0x3f8] sm:$0xff]
      %v779 = vunpack.c.l.b16 %v523
      %v780 = vunpack.c.h.b16 %v523
      %v781 = vunpack.c.l.b16 %v524
      %v782 = vunpack.c.h.b16 %v524
      %v783 = vunpack.c.l.b16 %v525
      %v784 = vunpack.c.h.b16 %v525
      %v785 = vunpack.c.l.b16 %v526
      %v786 = vunpack.c.h.b16 %v526
      %v787 = vunpack.c.l.b16 %v527
      %v788 = vunpack.c.h.b16 %v527
      %v789 = vunpack.c.l.b16 %v528
      %v790 = vunpack.c.h.b16 %v528
      %v791 = vunpack.c.l.b16 %v529
      %v792 = vunpack.c.h.b16 %v529
      %v793 = vunpack.c.l.b16 %v530
      %v794 = vunpack.c.h.b16 %v530
      %v795 = vunpack.c.l.b16 %v531
      %v796 = vunpack.c.h.b16 %v531
      %v797 = vunpack.c.l.b16 %v532
      %v798 = vunpack.c.h.b16 %v532
      %v799 = vunpack.c.l.b16 %v533
      %v800 = vunpack.c.h.b16 %v533
      %v801 = vunpack.c.l.b16 %v534
      %v802 = vunpack.c.h.b16 %v534
      %v803 = vunpack.c.l.b16 %v535
      %v804 = vunpack.c.h.b16 %v535
      %v805 = vunpack.c.l.b16 %v536
      %v806 = vunpack.c.h.b16 %v536
      %v807 = vunpack.c.l.b16 %v537
      %v808 = vunpack.c.h.b16 %v537
      %v809 = vunpack.c.l.b16 %v538
      %v810 = vunpack.c.h.b16 %v538
      %v811 = vunpack.c.l.b16 %v539
      %v812 = vunpack.c.h.b16 %v539
      %v813 = vunpack.c.l.b16 %v540
      %v814 = vunpack.c.h.b16 %v540
      %v815 = vunpack.c.l.b16 %v541
      %v816 = vunpack.c.h.b16 %v541
      %v817 = vunpack.c.l.b16 %v542
      %v818 = vunpack.c.h.b16 %v542
      %v819 = vunpack.c.l.b16 %v543
      %v820 = vunpack.c.h.b16 %v543
      %v821 = vunpack.c.l.b16 %v544
      %v822 = vunpack.c.h.b16 %v544
      %v823 = vunpack.c.l.b16 %v545
      %v824 = vunpack.c.h.b16 %v545
      %v825 = vunpack.c.l.b16 %v546
      %v826 = vunpack.c.h.b16 %v546
      %v827 = vunpack.c.l.b16 %v547
      %v828 = vunpack.c.h.b16 %v547
      %v829 = vunpack.c.l.b16 %v548
      %v830 = vunpack.c.h.b16 %v548
      %v831 = vunpack.c.l.b16 %v549
      %v832 = vunpack.c.h.b16 %v549
      %v833 = vunpack.c.l.b16 %v550
      %v834 = vunpack.c.h.b16 %v550
      %v835 = vunpack.c.l.b16 %v551
      %v836 = vunpack.c.h.b16 %v551
      %v837 = vunpack.c.l.b16 %v552
      %v838 = vunpack.c.h.b16 %v552
      %v839 = vunpack.c.l.b16 %v553
      %v840 = vunpack.c.h.b16 %v553
      %v841 = vunpack.c.l.b16 %v554
      %v842 = vunpack.c.h.b16 %v554
      %v843 = vunpack.c.l.b16 %v555
      %v844 = vunpack.c.h.b16 %v555
      %v845 = vunpack.c.l.b16 %v556
      %v846 = vunpack.c.h.b16 %v556
      %v847 = vunpack.c.l.b16 %v557
      %v848 = vunpack.c.h.b16 %v557
      %v849 = vunpack.c.l.b16 %v558
      %v850 = vunpack.c.h.b16 %v558
      %v851 = vunpack.c.l.b16 %v559
      %v852 = vunpack.c.h.b16 %v559
      %v853 = vunpack.c.l.b16 %v560
      %v854 = vunpack.c.h.b16 %v560
      %v855 = vunpack.c.l.b16 %v561
      %v856 = vunpack.c.h.b16 %v561
      %v857 = vunpack.c.l.b16 %v562
      %v858 = vunpack.c.h.b16 %v562
      %v859 = vunpack.c.l.b16 %v563
      %v860 = vunpack.c.h.b16 %v563
      %v861 = vunpack.c.l.b16 %v564
      %v862 = vunpack.c.h.b16 %v564
      %v863 = vunpack.c.l.b16 %v565
      %v864 = vunpack.c.h.b16 %v565
      %v865 = vunpack.c.l.b16 %v566
      %v866 = vunpack.c.h.b16 %v566
      %v867 = vunpack.c.l.b16 %v567
      %v868 = vunpack.c.h.b16 %v567
      %v869 = vunpack.c.l.b16 %v568
      %v870 = vunpack.c.h.b16 %v568
      %v871 = vunpack.c.l.b16 %v569
      %v872 = vunpack.c.h.b16 %v569
      %v873 = vunpack.c.l.b16 %v570
      %v874 = vunpack.c.h.b16 %v570
      %v875 = vunpack.c.l.b16 %v571
      %v876 = vunpack.c.h.b16 %v571
      %v877 = vunpack.c.l.b16 %v572
      %v878 = vunpack.c.h.b16 %v572
      %v879 = vunpack.c.l.b16 %v573
      %v880 = vunpack.c.h.b16 %v573
      %v881 = vunpack.c.l.b16 %v574
      %v882 = vunpack.c.h.b16 %v574
      %v883 = vunpack.c.l.b16 %v575
      %v884 = vunpack.c.h.b16 %v575
      %v885 = vunpack.c.l.b16 %v576
      %v886 = vunpack.c.h.b16 %v576
      %v887 = vunpack.c.l.b16 %v577
      %v888 = vunpack.c.h.b16 %v577
      %v889 = vunpack.c.l.b16 %v578
      %v890 = vunpack.c.h.b16 %v578
      %v891 = vunpack.c.l.b16 %v579
      %v892 = vunpack.c.h.b16 %v579
      %v893 = vunpack.c.l.b16 %v580
      %v894 = vunpack.c.h.b16 %v580
      %v895 = vunpack.c.l.b16 %v581
      %v896 = vunpack.c.h.b16 %v581
      %v897 = vunpack.c.l.b16 %v582
      %v898 = vunpack.c.h.b16 %v582
      %v899 = vunpack.c.l.b16 %v583
      %v900 = vunpack.c.h.b16 %v583
      %v901 = vunpack.c.l.b16 %v584
      %v902 = vunpack.c.h.b16 %v584
      %v903 = vunpack.c.l.b16 %v585
      %v904 = vunpack.c.h.b16 %v585
      %v905 = vunpack.c.l.b16 %v586
      %v906 = vunpack.c.h.b16 %v586
      %v907 = vunpack.c.l.b16 %v587
      %v908 = vunpack.c.h.b16 %v587
      %v909 = vunpack.c.l.b16 %v588
      %v910 = vunpack.c.h.b16 %v588
      %v911 = vunpack.c.l.b16 %v589
      %v912 = vunpack.c.h.b16 %v589
      %v913 = vunpack.c.l.b16 %v590
      %v914 = vunpack.c.h.b16 %v590
      %v915 = vunpack.c.l.b16 %v591
      %v916 = vunpack.c.h.b16 %v591
      %v917 = vunpack.c.l.b16 %v592
      %v918 = vunpack.c.h.b16 %v592
      %v919 = vunpack.c.l.b16 %v593
      %v920 = vunpack.c.h.b16 %v593
      %v921 = vunpack.c.l.b16 %v594
      %v922 = vunpack.c.h.b16 %v594
      %v923 = vunpack.c.l.b16 %v595
      %v924 = vunpack.c.h.b16 %v595
      %v925 = vunpack.c.l.b16 %v596
      %v926 = vunpack.c.h.b16 %v596
      %v927 = vunpack.c.l.b16 %v597
      %v928 = vunpack.c.h.b16 %v597
      %v929 = vunpack.c.l.b16 %v598
      %v930 = vunpack.c.h.b16 %v598
      %v931 = vunpack.c.l.b16 %v599
      %v932 = vunpack.c.h.b16 %v599
      %v933 = vunpack.c.l.b16 %v600
      %v934 = vunpack.c.h.b16 %v600
      %v935 = vunpack.c.l.b16 %v601
      %v936 = vunpack.c.h.b16 %v601
      %v937 = vunpack.c.l.b16 %v602
      %v938 = vunpack.c.h.b16 %v602
      %v939 = vunpack.c.l.b16 %v603
      %v940 = vunpack.c.h.b16 %v603
      %v941 = vunpack.c.l.b16 %v604
      %v942 = vunpack.c.h.b16 %v604
      %v943 = vunpack.c.l.b16 %v605
      %v944 = vunpack.c.h.b16 %v605
      %v945 = vunpack.c.l.b16 %v606
      %v946 = vunpack.c.h.b16 %v606
      %v947 = vunpack.c.l.b16 %v607
      %v948 = vunpack.c.h.b16 %v607
      %v949 = vunpack.c.l.b16 %v608
      %v950 = vunpack.c.h.b16 %v608
      %v951 = vunpack.c.l.b16 %v609
      %v952 = vunpack.c.h.b16 %v609
      %v953 = vunpack.c.l.b16 %v610
      %v954 = vunpack.c.h.b16 %v610
      %v955 = vunpack.c.l.b16 %v611
      %v956 = vunpack.c.h.b16 %v611
      %v957 = vunpack.c.l.b16 %v612
      %v958 = vunpack.c.h.b16 %v612
      %v959 = vunpack.c.l.b16 %v613
      %v960 = vunpack.c.h.b16 %v613
      %v961 = vunpack.c.l.b16 %v614
      %v962 = vunpack.c.h.b16 %v614
      %v963 = vunpack.c.l.b16 %v615
      %v964 = vunpack.c.h.b16 %v615
      %v965 = vunpack.c.l.b16 %v616
      %v966 = vunpack.c.h.b16 %v616
      %v967 = vunpack.c.l.b16 %v617
      %v968 = vunpack.c.h.b16 %v617
      %v969 = vunpack.c.l.b16 %v618
      %v970 = vunpack.c.h.b16 %v618
      %v971 = vunpack.c.l.b16 %v619
      %v972 = vunpack.c.h.b16 %v619
      %v973 = vunpack.c.l.b16 %v620
      %v974 = vunpack.c.h.b16 %v620
      %v975 = vunpack.c.l.b16 %v621
      %v976 = vunpack.c.h.b16 %v621
      %v977 = vunpack.c.l.b16 %v622
      %v978 = vunpack.c.h.b16 %v622
      %v979 = vunpack.c.l.b16 %v623
      %v980 = vunpack.c.h.b16 %v623
      %v981 = vunpack.c.l.b16 %v624
      %v982 = vunpack.c.h.b16 %v624
      %v983 = vunpack.c.l.b16 %v625
      %v984 = vunpack.c.h.b16 %v625
      %v985 = vunpack.c.l.b16 %v626
      %v986 = vunpack.c.h.b16 %v626
      %v987 = vunpack.c.l.b16 %v627
      %v988 = vunpack.c.h.b16 %v627
      %v989 = vunpack.c.l.b16 %v628
      %v990 = vunpack.c.h.b16 %v628
      %v991 = vunpack.c.l.b16 %v629
      %v992 = vunpack.c.h.b16 %v629
      %v993 = vunpack.c.l.b16 %v630
      %v994 = vunpack.c.h.b16 %v630
      %v995 = vunpack.c.l.b16 %v631
      %v996 = vunpack.c.h.b16 %v631
      %v997 = vunpack.c.l.b16 %v632
      %v998 = vunpack.c.h.b16 %v632
      %v999 = vunpack.c.l.b16 %v633
      %v1000 = vunpack.c.h.b16 %v633
      %v1001 = vunpack.c.l.b16 %v634
      %v1002 = vunpack.c.h.b16 %v634
      %v1003 = vunpack.c.l.b16 %v635
      %v1004 = vunpack.c.h.b16 %v635
      %v1005 = vunpack.c.l.b16 %v636
      %v1006 = vunpack.c.h.b16 %v636
      %v1007 = vunpack.c.l.b16 %v637
      %v1008 = vunpack.c.h.b16 %v637
      %v1009 = vunpack.c.l.b16 %v638
      %v1010 = vunpack.c.h.b16 %v638
      %v1011 = vunpack.c.l.b16 %v639
      %v1012 = vunpack.c.h.b16 %v639
      %v1013 = vunpack.c.l.b16 %v640
      %v1014 = vunpack.c.h.b16 %v640
      %v1015 = vunpack.c.l.b16 %v641
      %v1016 = vunpack.c.h.b16 %v641
      %v1017 = vunpack.c.l.b16 %v642
      %v1018 = vunpack.c.h.b16 %v642
      %v1019 = vunpack.c.l.b16 %v643
      %v1020 = vunpack.c.h.b16 %v643
      %v1021 = vunpack.c.l.b16 %v644
      %v1022 = vunpack.c.h.b16 %v644
      %v1023 = vunpack.c.l.b16 %v645
      %v1024 = vunpack.c.h.b16 %v645
      %v1025 = vunpack.c.l.b16 %v646
      %v1026 = vunpack.c.h.b16 %v646
      %v1027 = vunpack.c.l.b16 %v647
      %v1028 = vunpack.c.h.b16 %v647
      %v1029 = vunpack.c.l.b16 %v648
      %v1030 = vunpack.c.h.b16 %v648
      %v1031 = vunpack.c.l.b16 %v649
      %v1032 = vunpack.c.h.b16 %v649
      %v1033 = vunpack.c.l.b16 %v650
      %v1034 = vunpack.c.h.b16 %v650
      %v1035 = vpack.c.b16 %v787, %v779
      %v1036 = vpack.c.b16 %v788, %v780
      %v1037 = vpack.c.b16 %v789, %v781
      %v1038 = vpack.c.b16 %v790, %v782
      %v1039 = vpack.c.b16 %v791, %v783
      %v1040 = vpack.c.b16 %v792, %v784
      %v1041 = vpack.c.b16 %v793, %v785
      %v1042 = vpack.c.b16 %v794, %v786
      %v1043 = vpack.c.b16 %v803, %v795
      %v1044 = vpack.c.b16 %v804, %v796
      %v1045 = vpack.c.b16 %v805, %v797
      %v1046 = vpack.c.b16 %v806, %v798
      %v1047 = vpack.c.b16 %v807, %v799
      %v1048 = vpack.c.b16 %v808, %v800
      %v1049 = vpack.c.b16 %v809, %v801
      %v1050 = vpack.c.b16 %v810, %v802
      %v1051 = vpack.c.b16 %v819, %v811
      %v1052 = vpack.c.b16 %v820, %v812
      %v1053 = vpack.c.b16 %v821, %v813
      %v1054 = vpack.c.b16 %v822, %v814
      %v1055 = vpack.c.b16 %v823, %v815
      %v1056 = vpack.c.b16 %v824, %v816
      %v1057 = vpack.c.b16 %v825, %v817
      %v1058 = vpack.c.b16 %v826, %v818
      %v1059 = vpack.c.b16 %v835, %v827
      %v1060 = vpack.c.b16 %v836, %v828
      %v1061 = vpack.c.b16 %v837, %v829
      %v1062 = vpack.c.b16 %v838, %v830
      %v1063 = vpack.c.b16 %v839, %v831
      %v1064 = vpack.c.b16 %v840, %v832
      %v1065 = vpack.c.b16 %v841, %v833
      %v1066 = vpack.c.b16 %v842, %v834
      %v1067 = vpack.c.b16 %v851, %v843
      %v1068 = vpack.c.b16 %v852, %v844
      %v1069 = vpack.c.b16 %v853, %v845
      %v1070 = vpack.c.b16 %v854, %v846
      %v1071 = vpack.c.b16 %v855, %v847
      %v1072 = vpack.c.b16 %v856, %v848
      %v1073 = vpack.c.b16 %v857, %v849
      %v1074 = vpack.c.b16 %v858, %v850
      %v1075 = vpack.c.b16 %v867, %v859
      %v1076 = vpack.c.b16 %v868, %v860
      %v1077 = vpack.c.b16 %v869, %v861
      %v1078 = vpack.c.b16 %v870, %v862
      %v1079 = vpack.c.b16 %v871, %v863
      %v1080 = vpack.c.b16 %v872, %v864
      %v1081 = vpack.c.b16 %v873, %v865
      %v1082 = vpack.c.b16 %v874, %v866
      %v1083 = vpack.c.b16 %v883, %v875
      %v1084 = vpack.c.b16 %v884, %v876
      %v1085 = vpack.c.b16 %v885, %v877
      %v1086 = vpack.c.b16 %v886, %v878
      %v1087 = vpack.c.b16 %v887, %v879
      %v1088 = vpack.c.b16 %v888, %v880
      %v1089 = vpack.c.b16 %v889, %v881
      %v1090 = vpack.c.b16 %v890, %v882
      %v1091 = vpack.c.b16 %v899, %v891
      %v1092 = vpack.c.b16 %v900, %v892
      %v1093 = vpack.c.b16 %v901, %v893
      %v1094 = vpack.c.b16 %v902, %v894
      %v1095 = vpack.c.b16 %v903, %v895
      %v1096 = vpack.c.b16 %v904, %v896
      %v1097 = vpack.c.b16 %v905, %v897
      %v1098 = vpack.c.b16 %v906, %v898
      %v1099 = vpack.c.b16 %v915, %v907
      %v1100 = vpack.c.b16 %v916, %v908
      %v1101 = vpack.c.b16 %v917, %v909
      %v1102 = vpack.c.b16 %v918, %v910
      %v1103 = vpack.c.b16 %v919, %v911
      %v1104 = vpack.c.b16 %v920, %v912
      %v1105 = vpack.c.b16 %v921, %v913
      %v1106 = vpack.c.b16 %v922, %v914
      %v1107 = vpack.c.b16 %v931, %v923
      %v1108 = vpack.c.b16 %v932, %v924
      %v1109 = vpack.c.b16 %v933, %v925
      %v1110 = vpack.c.b16 %v934, %v926
      %v1111 = vpack.c.b16 %v935, %v927
      %v1112 = vpack.c.b16 %v936, %v928
      %v1113 = vpack.c.b16 %v937, %v929
      %v1114 = vpack.c.b16 %v938, %v930
      %v1115 = vpack.c.b16 %v947, %v939
      %v1116 = vpack.c.b16 %v948, %v940
      %v1117 = vpack.c.b16 %v949, %v941
      %v1118 = vpack.c.b16 %v950, %v942
      %v1119 = vpack.c.b16 %v951, %v943
      %v1120 = vpack.c.b16 %v952, %v944
      %v1121 = vpack.c.b16 %v953, %v945
      %v1122 = vpack.c.b16 %v954, %v946
      %v1123 = vpack.c.b16 %v963, %v955
      %v1124 = vpack.c.b16 %v964, %v956
      %v1125 = vpack.c.b16 %v965, %v957
      %v1126 = vpack.c.b16 %v966, %v958
      %v1127 = vpack.c.b16 %v967, %v959
      %v1128 = vpack.c.b16 %v968, %v960
      %v1129 = vpack.c.b16 %v969, %v961
      %v1130 = vpack.c.b16 %v970, %v962
      %v1131 = vpack.c.b16 %v979, %v971
      %v1132 = vpack.c.b16 %v980, %v972
      %v1133 = vpack.c.b16 %v981, %v973
      %v1134 = vpack.c.b16 %v982, %v974
      %v1135 = vpack.c.b16 %v983, %v975
      %v1136 = vpack.c.b16 %v984, %v976
      %v1137 = vpack.c.b16 %v985, %v977
      %v1138 = vpack.c.b16 %v986, %v978
      %v1139 = vpack.c.b16 %v995, %v987
      %v1140 = vpack.c.b16 %v996, %v988
      %v1141 = vpack.c.b16 %v997, %v989
      %v1142 = vpack.c.b16 %v998, %v990
      %v1143 = vpack.c.b16 %v999, %v991
      %v1144 = vpack.c.b16 %v1000, %v992
      %v1145 = vpack.c.b16 %v1001, %v993
      %v1146 = vpack.c.b16 %v1002, %v994
      %v1147 = vpack.c.b16 %v1011, %v1003
      %v1148 = vpack.c.b16 %v1012, %v1004
      %v1149 = vpack.c.b16 %v1013, %v1005
      %v1150 = vpack.c.b16 %v1014, %v1006
      %v1151 = vpack.c.b16 %v1015, %v1007
      %v1152 = vpack.c.b16 %v1016, %v1008
      %v1153 = vpack.c.b16 %v1017, %v1009
      %v1154 = vpack.c.b16 %v1018, %v1010
      %v1155 = vpack.c.b16 %v1027, %v1019
      %v1156 = vpack.c.b16 %v1028, %v1020
      %v1157 = vpack.c.b16 %v1029, %v1021
      %v1158 = vpack.c.b16 %v1030, %v1022
      %v1159 = vpack.c.b16 %v1031, %v1023
      %v1160 = vpack.c.b16 %v1032, %v1024
      %v1161 = vpack.c.b16 %v1033, %v1025
      %v1162 = vpack.c.b16 %v1034, %v1026
      %1291 = vmatprep.subr.bf16.mxu0 %v1036
      %1292 = vmatpush1.bf16.msra.mxu0 %v1035
      %1293 = vmatprep.subr.bf16.mxu0 %v1044
      %1294 = vmatpush1.bf16.msra.mxu0 %v1043
      %1295 = vmatprep.subr.bf16.mxu0 %v1052
      %1296 = vmatpush1.bf16.msra.mxu0 %v1051
      %1297 = vmatprep.subr.bf16.mxu0 %v1060
      %1298 = vmatpush1.bf16.msra.mxu0 %v1059
      %1299 = vmatprep.subr.bf16.mxu0 %v1068
      %1300 = vmatpush1.bf16.msra.mxu0 %v1067
      %1301 = vmatprep.subr.bf16.mxu0 %v1076
      %1302 = vmatpush1.bf16.msra.mxu0 %v1075
      %1303 = vmatprep.subr.bf16.mxu0 %v1084
      %1304 = vmatpush1.bf16.msra.mxu0 %v1083
      %1305 = vmatprep.subr.bf16.mxu0 %v1092
      %1306 = vmatpush1.bf16.msra.mxu0 %v1091
      %1307 = vmatprep.subr.bf16.mxu0 %v1100
      %1308 = vmatpush1.bf16.msra.mxu0 %v1099
      %1309 = vmatprep.subr.bf16.mxu0 %v1108
      %1310 = vmatpush1.bf16.msra.mxu0 %v1107
      %1311 = vmatprep.subr.bf16.mxu0 %v1116
      %1312 = vmatpush1.bf16.msra.mxu0 %v1115
      %1313 = vmatprep.subr.bf16.mxu0 %v1124
      %1314 = vmatpush1.bf16.msra.mxu0 %v1123
      %1315 = vmatprep.subr.bf16.mxu0 %v1132
      %1316 = vmatpush1.bf16.msra.mxu0 %v1131
      %1317 = vmatprep.subr.bf16.mxu0 %v1140
      %1318 = vmatpush1.bf16.msra.mxu0 %v1139
      %1319 = vmatprep.subr.bf16.mxu0 %v1148
      %1320 = vmatpush1.bf16.msra.mxu0 %v1147
      %1321 = vmatprep.subr.bf16.mxu0 %v1156
      %1322 = vmatpush1.bf16.msra.mxu0 %v1155
      %1323 = vmatprep.mubr.bf16.mxu0 %v522
      %1324 = vmatmul.mubr.bf16.gmra.mrb[0].mxu0 %v521
      %v1325 = vpop.f32.mrb[0].mxu0
      %v1326 = vadd.f32 0.0, %v1325
      %v1327 = vpop.f32.mrb[0].mxu0
      %v1328 = vadd.f32 0.0, %v1327
      %v1329 = vpop.f32.mrb[0].mxu0
      %v1330 = vadd.f32 0.0, %v1329
      %v1331 = vpop.f32.mrb[0].mxu0
      %v1332 = vadd.f32 0.0, %v1331
      %1333 = vdwg.mxu0
      %1334 = vmatprep.subr.bf16.mxu0 %v1038
      %1335 = vmatpush1.bf16.msra.mxu0 %v1037
      %1336 = vmatprep.subr.bf16.mxu0 %v1046
      %1337 = vmatpush1.bf16.msra.mxu0 %v1045
      %1338 = vmatprep.subr.bf16.mxu0 %v1054
      %1339 = vmatpush1.bf16.msra.mxu0 %v1053
      %1340 = vmatprep.subr.bf16.mxu0 %v1062
      %1341 = vmatpush1.bf16.msra.mxu0 %v1061
      %1342 = vmatprep.subr.bf16.mxu0 %v1070
      %1343 = vmatpush1.bf16.msra.mxu0 %v1069
      %1344 = vmatprep.subr.bf16.mxu0 %v1078
      %1345 = vmatpush1.bf16.msra.mxu0 %v1077
      %1346 = vmatprep.subr.bf16.mxu0 %v1086
      %1347 = vmatpush1.bf16.msra.mxu0 %v1085
      %1348 = vmatprep.subr.bf16.mxu0 %v1094
      %1349 = vmatpush1.bf16.msra.mxu0 %v1093
      %1350 = vmatprep.subr.bf16.mxu0 %v1102
      %1351 = vmatpush1.bf16.msra.mxu0 %v1101
      %1352 = vmatprep.subr.bf16.mxu0 %v1110
      %1353 = vmatpush1.bf16.msra.mxu0 %v1109
      %1354 = vmatprep.subr.bf16.mxu0 %v1118
      %1355 = vmatpush1.bf16.msra.mxu0 %v1117
      %1356 = vmatprep.subr.bf16.mxu0 %v1126
      %1357 = vmatpush1.bf16.msra.mxu0 %v1125
      %1358 = vmatprep.subr.bf16.mxu0 %v1134
      %1359 = vmatpush1.bf16.msra.mxu0 %v1133
      %1360 = vmatprep.subr.bf16.mxu0 %v1142
      %1361 = vmatpush1.bf16.msra.mxu0 %v1141
      %1362 = vmatprep.subr.bf16.mxu0 %v1150
      %1363 = vmatpush1.bf16.msra.mxu0 %v1149
      %1364 = vmatprep.subr.bf16.mxu0 %v1158
      %1365 = vmatpush1.bf16.msra.mxu0 %v1157
      %1366 = vmatprep.mubr.bf16.mxu0 %v522
      %1367 = vmatmul.mubr.bf16.gmra.mrb[0].mxu0 %v521
      %v1368 = vpop.f32.mrb[0].mxu0
      %v1369 = vadd.f32 0.0, %v1368
      %v1370 = vpop.f32.mrb[0].mxu0
      %v1371 = vadd.f32 0.0, %v1370
      %v1372 = vpop.f32.mrb[0].mxu0
      %v1373 = vadd.f32 0.0, %v1372
      %v1374 = vpop.f32.mrb[0].mxu0
      %v1375 = vadd.f32 0.0, %v1374
      %1376 = vdwg.mxu0
      %1377 = vmatprep.subr.bf16.mxu0 %v1040
      %1378 = vmatpush1.bf16.msra.mxu0 %v1039
      %1379 = vmatprep.subr.bf16.mxu0 %v1048
      %1380 = vmatpush1.bf16.msra.mxu0 %v1047
      %1381 = vmatprep.subr.bf16.mxu0 %v1056
      %1382 = vmatpush1.bf16.msra.mxu0 %v1055
      %1383 = vmatprep.subr.bf16.mxu0 %v1064
      %1384 = vmatpush1.bf16.msra.mxu0 %v1063
      %1385 = vmatprep.subr.bf16.mxu0 %v1072
      %1386 = vmatpush1.bf16.msra.mxu0 %v1071
      %1387 = vmatprep.subr.bf16.mxu0 %v1080
      %1388 = vmatpush1.bf16.msra.mxu0 %v1079
      %1389 = vmatprep.subr.bf16.mxu0 %v1088
      %1390 = vmatpush1.bf16.msra.mxu0 %v1087
      %1391 = vmatprep.subr.bf16.mxu0 %v1096
      %1392 = vmatpush1.bf16.msra.mxu0 %v1095
      %1393 = vmatprep.subr.bf16.mxu0 %v1104
      %1394 = vmatpush1.bf16.msra.mxu0 %v1103
      %1395 = vmatprep.subr.bf16.mxu0 %v1112
      %1396 = vmatpush1.bf16.msra.mxu0 %v1111
      %1397 = vmatprep.subr.bf16.mxu0 %v1120
      %1398 = vmatpush1.bf16.msra.mxu0 %v1119
      %1399 = vmatprep.subr.bf16.mxu0 %v1128
      %1400 = vmatpush1.bf16.msra.mxu0 %v1127
      %1401 = vmatprep.subr.bf16.mxu0 %v1136
      %1402 = vmatpush1.bf16.msra.mxu0 %v1135
      %1403 = vmatprep.subr.bf16.mxu0 %v1144
      %1404 = vmatpush1.bf16.msra.mxu0 %v1143
      %1405 = vmatprep.subr.bf16.mxu0 %v1152
      %1406 = vmatpush1.bf16.msra.mxu0 %v1151
      %1407 = vmatprep.subr.bf16.mxu0 %v1160
      %1408 = vmatpush1.bf16.msra.mxu0 %v1159
      %1409 = vmatprep.mubr.bf16.mxu0 %v522
      %1410 = vmatmul.mubr.bf16.gmra.mrb[0].mxu0 %v521
      %v1411 = vpop.f32.mrb[0].mxu0
      %v1412 = vadd.f32 0.0, %v1411
      %v1413 = vpop.f32.mrb[0].mxu0
      %v1414 = vadd.f32 0.0, %v1413
      %v1415 = vpop.f32.mrb[0].mxu0
      %v1416 = vadd.f32 0.0, %v1415
      %v1417 = vpop.f32.mrb[0].mxu0
      %v1418 = vadd.f32 0.0, %v1417
      %1419 = vdwg.mxu0
      %1420 = vmatprep.subr.bf16.mxu0 %v1042
      %1421 = vmatpush1.bf16.msra.mxu0 %v1041
      %1422 = vmatprep.subr.bf16.mxu0 %v1050
      %1423 = vmatpush1.bf16.msra.mxu0 %v1049
      %1424 = vmatprep.subr.bf16.mxu0 %v1058
      %1425 = vmatpush1.bf16.msra.mxu0 %v1057
      %1426 = vmatprep.subr.bf16.mxu0 %v1066
      %1427 = vmatpush1.bf16.msra.mxu0 %v1065
      %1428 = vmatprep.subr.bf16.mxu0 %v1074
      %1429 = vmatpush1.bf16.msra.mxu0 %v1073
      %1430 = vmatprep.subr.bf16.mxu0 %v1082
      %1431 = vmatpush1.bf16.msra.mxu0 %v1081
      %1432 = vmatprep.subr.bf16.mxu0 %v1090
      %1433 = vmatpush1.bf16.msra.mxu0 %v1089
      %1434 = vmatprep.subr.bf16.mxu0 %v1098
      %1435 = vmatpush1.bf16.msra.mxu0 %v1097
      %1436 = vmatprep.subr.bf16.mxu0 %v1106
      %1437 = vmatpush1.bf16.msra.mxu0 %v1105
      %1438 = vmatprep.subr.bf16.mxu0 %v1114
      %1439 = vmatpush1.bf16.msra.mxu0 %v1113
      %1440 = vmatprep.subr.bf16.mxu0 %v1122
      %1441 = vmatpush1.bf16.msra.mxu0 %v1121
      %1442 = vmatprep.subr.bf16.mxu0 %v1130
      %1443 = vmatpush1.bf16.msra.mxu0 %v1129
      %1444 = vmatprep.subr.bf16.mxu0 %v1138
      %1445 = vmatpush1.bf16.msra.mxu0 %v1137
      %1446 = vmatprep.subr.bf16.mxu0 %v1146
      %1447 = vmatpush1.bf16.msra.mxu0 %v1145
      %1448 = vmatprep.subr.bf16.mxu0 %v1154
      %1449 = vmatpush1.bf16.msra.mxu0 %v1153
      %1450 = vmatprep.subr.bf16.mxu0 %v1162
      %1451 = vmatpush1.bf16.msra.mxu0 %v1161
      %1452 = vmatprep.mubr.bf16.mxu0 %v522
      %1453 = vmatmul.mubr.bf16.gmra.mrb[0].mxu0 %v521
      %v1454 = vpop.f32.mrb[0].mxu0
      %v1455 = vadd.f32 0.0, %v1454
      %v1456 = vpop.f32.mrb[0].mxu0
      %v1457 = vadd.f32 0.0, %v1456
      %v1458 = vpop.f32.mrb[0].mxu0
      %v1459 = vadd.f32 0.0, %v1458
      %v1460 = vpop.f32.mrb[0].mxu0
      %v1461 = vadd.f32 0.0, %v1460
      %1462 = vdwg.mxu0
      %v1463 = vld [vmem:[%s401] sm:$0xff]
      %v1464 = vld [vmem:[%s401 + $0x8] sm:$0xff]
      %v1465 = vld [vmem:[%s401 + $0x10] sm:$0xff]
      %v1466 = vld [vmem:[%s401 + $0x18] sm:$0xff]
      %v1467 = vld [vmem:[%s401 + $0x20] sm:$0xff]
      %v1468 = vld [vmem:[%s401 + $0x28] sm:$0xff]
      %v1469 = vld [vmem:[%s401 + $0x30] sm:$0xff]
      %v1470 = vld [vmem:[%s401 + $0x38] sm:$0xff]
      %v1471 = vunpack.c.l.bf16 %v1463
      %v1472 = vunpack.c.h.bf16 %v1463
      %v1473 = vunpack.c.l.bf16 %v1464
      %v1474 = vunpack.c.h.bf16 %v1464
      %v1475 = vunpack.c.l.bf16 %v1465
      %v1476 = vunpack.c.h.bf16 %v1465
      %v1477 = vunpack.c.l.bf16 %v1466
      %v1478 = vunpack.c.h.bf16 %v1466
      %v1479 = vunpack.c.l.bf16 %v1467
      %v1480 = vunpack.c.h.bf16 %v1467
      %v1481 = vunpack.c.l.bf16 %v1468
      %v1482 = vunpack.c.h.bf16 %v1468
      %v1483 = vunpack.c.l.bf16 %v1469
      %v1484 = vunpack.c.h.bf16 %v1469
      %v1485 = vunpack.c.l.bf16 %v1470
      %v1486 = vunpack.c.h.bf16 %v1470
      %v1487 = vsub.f32 %v1326, %v1471
      %v1488 = vsub.f32 %v1328, %v1472
      %v1489 = vsub.f32 %v1369, %v1473
      %v1490 = vsub.f32 %v1371, %v1474
      %v1491 = vsub.f32 %v1412, %v1475
      %v1492 = vsub.f32 %v1414, %v1476
      %v1493 = vsub.f32 %v1455, %v1477
      %v1494 = vsub.f32 %v1457, %v1478
      %v1495 = vsub.f32 %v1330, %v1479
      %v1496 = vsub.f32 %v1332, %v1480
      %v1497 = vsub.f32 %v1373, %v1481
      %v1498 = vsub.f32 %v1375, %v1482
      %v1499 = vsub.f32 %v1416, %v1483
      %v1500 = vsub.f32 %v1418, %v1484
      %v1501 = vsub.f32 %v1459, %v1485
      %v1502 = vsub.f32 %v1461, %v1486
      %v1503 = vld [vmem:[%s411] sm:$0xff]
      %v1504 = vmul.f32 %v1487, %v1487
      %v1505 = vmul.f32 %v1488, %v1488
      %v1506 = vmul.f32 %v1489, %v1489
      %v1507 = vmul.f32 %v1490, %v1490
      %v1508 = vmul.f32 %v1491, %v1491
      %v1509 = vmul.f32 %v1492, %v1492
      %v1510 = vmul.f32 %v1493, %v1493
      %v1511 = vmul.f32 %v1494, %v1494
      %v1512 = vmul.f32 %v1495, %v1495
      %v1513 = vmul.f32 %v1496, %v1496
      %v1514 = vmul.f32 %v1497, %v1497
      %v1515 = vmul.f32 %v1498, %v1498
      %v1516 = vmul.f32 %v1499, %v1499
      %v1517 = vmul.f32 %v1500, %v1500
      %v1518 = vmul.f32 %v1501, %v1501
      %v1519 = vmul.f32 %v1502, %v1502
      %v1520 = vadd.f32 %v1504, %v1512
      %v1521 = vrot.slane %v1520, 4
      %v1522 = vadd.f32 %v1520, %v1521
      %v1523 = vrot.slane %v1522, 2
      %v1524 = vadd.f32 %v1522, %v1523
      %v1525 = vrot.slane %v1524, 1
      %v1526 = vadd.f32 %v1524, %v1525
      %v1527 = vadd.f32 %v1505, %v1513
      %v1528 = vrot.slane %v1527, 4
      %v1529 = vadd.f32 %v1527, %v1528
      %v1530 = vrot.slane %v1529, 2
      %v1531 = vadd.f32 %v1529, %v1530
      %v1532 = vrot.slane %v1531, 1
      %v1533 = vadd.f32 %v1531, %v1532
      %v1534 = vadd.f32 %v1506, %v1514
      %v1535 = vrot.slane %v1534, 4
      %v1536 = vadd.f32 %v1534, %v1535
      %v1537 = vrot.slane %v1536, 2
      %v1538 = vadd.f32 %v1536, %v1537
      %v1539 = vrot.slane %v1538, 1
      %v1540 = vadd.f32 %v1538, %v1539
      %v1541 = vadd.f32 %v1507, %v1515
      %v1542 = vrot.slane %v1541, 4
      %v1543 = vadd.f32 %v1541, %v1542
      %v1544 = vrot.slane %v1543, 2
      %v1545 = vadd.f32 %v1543, %v1544
      %v1546 = vrot.slane %v1545, 1
      %v1547 = vadd.f32 %v1545, %v1546
      %v1548 = vadd.f32 %v1508, %v1516
      %v1549 = vrot.slane %v1548, 4
      %v1550 = vadd.f32 %v1548, %v1549
      %v1551 = vrot.slane %v1550, 2
      %v1552 = vadd.f32 %v1550, %v1551
      %v1553 = vrot.slane %v1552, 1
      %v1554 = vadd.f32 %v1552, %v1553
      %v1555 = vadd.f32 %v1509, %v1517
      %v1556 = vrot.slane %v1555, 4
      %v1557 = vadd.f32 %v1555, %v1556
      %v1558 = vrot.slane %v1557, 2
      %v1559 = vadd.f32 %v1557, %v1558
      %v1560 = vrot.slane %v1559, 1
      %v1561 = vadd.f32 %v1559, %v1560
      %v1562 = vadd.f32 %v1510, %v1518
      %v1563 = vrot.slane %v1562, 4
      %v1564 = vadd.f32 %v1562, %v1563
      %v1565 = vrot.slane %v1564, 2
      %v1566 = vadd.f32 %v1564, %v1565
      %v1567 = vrot.slane %v1566, 1
      %v1568 = vadd.f32 %v1566, %v1567
      %v1569 = vadd.f32 %v1511, %v1519
      %v1570 = vrot.slane %v1569, 4
      %v1571 = vadd.f32 %v1569, %v1570
      %v1572 = vrot.slane %v1571, 2
      %v1573 = vadd.f32 %v1571, %v1572
      %v1574 = vrot.slane %v1573, 1
      %v1575 = vadd.f32 %v1573, %v1574
      %v1584 = vcombine.low %v1526, %v1533
      %v1585 = vcombine.low %v1540, %v1547
      %v1586 = vcombine.low %v1554, %v1561
      %v1587 = vcombine.low %v1568, %v1575
      %v1589 = vunpack.c.l.s4 1966171168
      %v1590 = vunpack.c.0.s8 %v1589
      %v1591 = vlaneseq
      %v1592 = vshrl.u32 %v1591, 7
      %v1593 = vsub.s32 %v1590, %v1592
      %v1594 = vrot.slane %v1584, %v1593
      %v1596 = vunpack.c.l.s4 1966171168
      %v1597 = vunpack.c.0.s8 %v1596
      %v1598 = vlaneseq
      %v1599 = vshrl.u32 %v1598, 7
      %v1600 = vsub.s32 %v1597, %v1599
      %v1601 = vrot.slane %v1585, %v1600
      %v1603 = vunpack.c.l.s4 1966171168
      %v1604 = vunpack.c.0.s8 %v1603
      %v1605 = vlaneseq
      %v1606 = vshrl.u32 %v1605, 7
      %v1607 = vsub.s32 %v1604, %v1606
      %v1608 = vrot.slane %v1586, %v1607
      %v1610 = vunpack.c.l.s4 1966171168
      %v1611 = vunpack.c.0.s8 %v1610
      %v1612 = vlaneseq
      %v1613 = vshrl.u32 %v1612, 7
      %v1614 = vsub.s32 %v1611, %v1613
      %v1615 = vrot.slane %v1587, %v1614
      %v1616 = vcombine.low %v1594, %v1601
      %v1617 = vcombine.low %v1608, %v1615
      %v1619 = vunpack.c.l.s4 1966171168
      %v1620 = vunpack.c.0.s8 %v1619
      %v1621 = vlaneseq
      %v1622 = vshrl.u32 %v1621, 7
      %v1623 = vsub.s32 %v1620, %v1622
      %v1624 = vrot.slane %v1616, %v1623
      %v1626 = vunpack.c.l.s4 1966171168
      %v1627 = vunpack.c.0.s8 %v1626
      %v1628 = vlaneseq
      %v1629 = vshrl.u32 %v1628, 7
      %v1630 = vsub.s32 %v1627, %v1629
      %v1631 = vrot.slane %v1617, %v1630
      %v1632 = vcombine.low %v1624, %v1631
      %v1634 = vadd.f32 %v1503, %v1632
      %1635 = vst [vmem:[%s411] sm:$0xff] %v1634
      %p1636 = scmp.lt.s32.totalorder %s22, 1
      %s1637 = scalar_select %p1636, %s22, 1
      %p1638 = scmp.lt.s32.totalorder %s23, 0
      %s1639 = scalar_select %p1638, %s23, 0
      %s1640 = smul.addr %s1639, 8
      %s1641 = smul.addr %s1637, 8
      %s1642 = sadd.s32 %s1640, %s1641
      %s1643 = scalar_lea.vmem %s6, %s1642
      // Predicated region
      $region49: #{mose_loss.3} parent=43 // pred_check
        %p1644 = pneg %p217
      $region50: #{mose_loss.3} parent=43 // pred_check_branch
        %1646 = sbr.rel (%p1644) target = $region52
      $region51: #{mose_loss.3} parent=43 // pred_region
        _
      $region52: #{mose_loss.3} parent=43 // pred_fallthru
        _
    $region44: #{mose_loss.3} parent=5 // pred_fallthru
      _
    %p1647 = scmp.le.s32.totalorder 2, %s12
    // Predicated region
    $region53: #{mose_loss.3} parent=5 // pred_check
      %p1648 = pneg %p1647
    $region54: #{mose_loss.3} parent=5 // pred_check_branch
      %1650 = sbr.rel (%p1648) target = $region56
    $region55: #{mose_loss.3} parent=5 // pred_region
      %s1651 = ssub.s32 %s12, 2
      // Predicated region
      $region57: #{mose_loss.3} parent=55 // pred_check
        %p1652 = pneg %p223
      $region58: #{mose_loss.3} parent=55 // pred_check_branch
        %1654 = sbr.rel (%p1652) target = $region60
      $region59: #{mose_loss.3} parent=55 // pred_region
        %p1655 = scmp.lt.s32.totalorder %s25, 1
        %s1656 = scalar_select %p1655, %s25, 1
        %p1657 = scmp.lt.s32.totalorder %s26, 0
        %s1658 = scalar_select %p1657, %s26, 0
        %s1659 = smul.addr %s1658, 8
        %s1660 = smul.addr %s1656, 8
        %s1661 = sadd.s32 %s1659, %s1660
        %s1662 = scalar_lea.vmem %s6, %s1661
      $region60: #{mose_loss.3} parent=55 // pred_fallthru
        _
    $region56: #{mose_loss.3} parent=5 // pred_fallthru
      _
  $region6: #{mose_loss.3} parent=0 // loop_footer
    %s16 = sadd.s32 1, %s12
  $region7: #{mose_loss.3} parent=0 // loop_footer_branch
    %11 = sbr.rel target = $region3
  $region8: #{mose_loss.3} parent=0 // loop_exit
    _

</llo_original>
